<compile_context>
chip_gen: v5e
topology: v5e:2x2
jax: 0.10.0
libtpu: 0.0.40
codegen_flags: <defaults>
</compile_context>

<pallas_src>
import math
import jax
import jax.numpy as jnp
from jax import lax
from jax.experimental import pallas as pl

# ---------------- config (small, consistent with the module) ----------------
PAD_IDX = 0
OUTPUT_DIC_SIZE = 16
VOCAB = 50
BATCH = 2            # config.batch_size
SEQ_LEN = 8          # seq_len
D_MODEL = 32         # config.embedding_size
NHEAD = 4            # config.nhead
HEAD_DIM = D_MODEL // NHEAD
HIDDEN = 64          # config.hidden_size (FFN dim)
NLAYERS = 2          # config.nlayers
LN_EPS = 1e-5
NEG_INF = -1e30      # additive mask value (matches masked_fill(-inf) up to fp)
ROWS = BATCH * SEQ_LEN
O_PAD = 128          # lane-dense padded classifier width (sliced outside)


# ---------------- kernel helpers ----------------
def _layer_norm(x, gamma, beta):
    mean = jnp.mean(x, axis=-1, keepdims=True)
    var = jnp.mean(jnp.square(x - mean), axis=-1, keepdims=True)
    return (x - mean) * lax.rsqrt(var + LN_EPS) * gamma + beta


# ---------------- the single fused Pallas kernel ----------------
def fused_forward_kernel(x_ref, pe_ref, bias_ref,
                         wqkv_ref, bqkv_ref, wo_ref, bo_ref,
                         w1_ref, b1_ref, w2_ref, b2_ref,
                         g1_ref, be1_ref, g2_ref, be2_ref,
                         fcw_ref, fcb_ref, o_ref):
    """Pos-enc add + NLAYERS post-norm encoder layers + classifier, all in VMEM."""
    scale = 1.0 / math.sqrt(HEAD_DIM)

    x = x_ref[...] + pe_ref[...]        # (ROWS, D); dropout is identity in eval
    bias = bias_ref[...]                # (ROWS, ROWS) block-diag batch + key-pad mask

    for l in range(NLAYERS):            # static loop: all weights resident in VMEM
        wqkv = wqkv_ref[l]; bqkv = bqkv_ref[l]
        wo = wo_ref[l];     bo = bo_ref[l]
        w1 = w1_ref[l];     b1 = b1_ref[l]
        w2 = w2_ref[l];     b2 = b2_ref[l]
        g1 = g1_ref[l];     be1 = be1_ref[l]
        g2 = g2_ref[l];     be2 = be2_ref[l]

        # ---- fused QKV projection: one (ROWS, D) @ (D, 3D) matmul ----
        qkv = jnp.dot(x, wqkv, preferred_element_type=jnp.float32) + bqkv
        q = qkv[:, 0:D_MODEL]
        k = qkv[:, D_MODEL:2 * D_MODEL]
        v = qkv[:, 2 * D_MODEL:3 * D_MODEL]

        # ---- multi-head self-attention over the whole batch at once ----
        attn = jnp.zeros((ROWS, D_MODEL), jnp.float32)
        for h in range(NHEAD):           # static head loop (4)
            lo = h * HEAD_DIM
            hi = lo + HEAD_DIM
            qh = q[:, lo:hi]
            kh = k[:, lo:hi]
            vh = v[:, lo:hi]
            # q @ k^T without an explicit transpose (contract last dims)
            s = lax.dot_general(qh, kh, (((1,), (1,)), ((), ())),
                                preferred_element_type=jnp.float32)
            s = s * scale + bias         # kill cross-batch and padded-key entries
            m = jnp.max(s, axis=-1, keepdims=True)
            e = jnp.exp(s - m)
            p = e * pl.reciprocal(jnp.sum(e, axis=-1, keepdims=True), approx=True)
            ctx = jnp.dot(p, vh, preferred_element_type=jnp.float32)     # (ROWS, hd)
            # per-head slice of Wo, summed -> no lane-concat of head outputs
            attn = attn + jnp.dot(ctx, wo[lo:hi, :],
                                  preferred_element_type=jnp.float32)
        attn = attn + bo

        # ---- residual + LayerNorm 1 (post-norm) ----
        x = _layer_norm(x + attn, g1, be1)

        # ---- feed-forward (relu) ----
        ff = jnp.dot(x, w1, preferred_element_type=jnp.float32) + b1
        ff = jnp.maximum(ff, 0.0)
        ff = jnp.dot(ff, w2, preferred_element_type=jnp.float32) + b2

        # ---- residual + LayerNorm 2 ----
        x = _layer_norm(x + ff, g2, be2)

    # ---- classifier: view(B, S*D) @ fc_w  ==  sum_s x[b, s, :] @ fc_w[s*D:(s+1)*D, :]
    x3 = x.reshape(BATCH, SEQ_LEN, D_MODEL)   # sublane-aligned split, no lane movement
    acc = jnp.zeros((BATCH, O_PAD), jnp.float32)
    for s in range(SEQ_LEN):
        acc = acc + jnp.dot(x3[:, s, :], fcw_ref[s],
                            preferred_element_type=jnp.float32)
    o_ref[...] = acc + fcb_ref[...]           # lane-dense (128-wide) store


# ---------------- wrappers ----------------
def run_fused_forward(x2d, pe2d, bias, stacked, fcw3, fcb):
    """Single pallas_call, no grid: everything fits in VMEM."""
    return pl.pallas_call(
        fused_forward_kernel,
        out_shape=jax.ShapeDtypeStruct((BATCH, O_PAD), jnp.float32),
    )(x2d, pe2d, bias, *stacked, fcw3, fcb)


def transformer_classify_forward(src, emb_mat, pe, stacked, fcw3, fcb):
    """Forward pass of TransformerClassifyModel (inference mode)."""
    B, S = src.shape
    R = B * S
    # glue: embedding gather (no clean Pallas equivalent for a table gather at
    # this size) + operand prep; all fused by XLA into one tiny op.
    x2d = emb_mat[src].reshape(R, D_MODEL)
    # reproduce the module's pe[:x.size(0)] -> (B,1,D) broadcast-over-seq semantics
    pe2d = jnp.broadcast_to(pe[:B], (B, S, D_MODEL)).reshape(R, D_MODEL)
    # combined additive attention bias: block-diagonal batch mask + key padding
    row_batch = jnp.arange(R, dtype=jnp.int32) // S
    same_batch = row_batch[:, None] == row_batch[None, :]
    key_valid = (src.reshape(R) != PAD_IDX)[None, :]
    bias = jnp.where(same_batch & key_valid, 0.0, NEG_INF).astype(jnp.float32)

    out_pad = run_fused_forward(x2d, pe2d, bias, stacked, fcw3, fcb)
    return out_pad[:, :OUTPUT_DIC_SIZE]


def make_positional_encoding(max_len, d_model):
    position = jnp.arange(max_len, dtype=jnp.float32)[:, None]
    div_term = jnp.exp(jnp.arange(0, d_model, 2, dtype=jnp.float32)
                       * (-math.log(10000.0) / d_model))
    pe = jnp.zeros((max_len, d_model), jnp.float32)
    pe = pe.at[:, 0::2].set(jnp.sin(position * div_term))
    pe = pe.at[:, 1::2].set(jnp.cos(position * div_term))
    return pe[:, None, :]        # (max_len, 1, d_model), same as the PyTorch buffer


def init_params(key):
    ks = iter(jax.random.split(key, 4 + NLAYERS * 12))

    def rnd(shape, scale=0.1):
        return jax.random.normal(next(ks), shape, jnp.float32) * scale

    emb_mat = rnd((VOCAB, D_MODEL), 1.0)

    names = ("wqkv", "bqkv", "wo", "bo", "w1", "b1", "w2", "b2",
             "g1", "be1", "g2", "be2")
    per_layer = {n: [] for n in names}
    for _ in range(NLAYERS):
        wq, wk, wv = rnd((D_MODEL, D_MODEL)), rnd((D_MODEL, D_MODEL)), rnd((D_MODEL, D_MODEL))
        bq, bk, bv = rnd((1, D_MODEL)), rnd((1, D_MODEL)), rnd((1, D_MODEL))
        per_layer["wqkv"].append(jnp.concatenate([wq, wk, wv], axis=1))   # (D, 3D)
        per_layer["bqkv"].append(jnp.concatenate([bq, bk, bv], axis=1))   # (1, 3D)
        per_layer["wo"].append(rnd((D_MODEL, D_MODEL)))
        per_layer["bo"].append(rnd((1, D_MODEL)))
        per_layer["w1"].append(rnd((D_MODEL, HIDDEN)))
        per_layer["b1"].append(rnd((1, HIDDEN)))
        per_layer["w2"].append(rnd((HIDDEN, D_MODEL)))
        per_layer["b2"].append(rnd((1, D_MODEL)))
        per_layer["g1"].append(jnp.ones((1, D_MODEL), jnp.float32))
        per_layer["be1"].append(jnp.zeros((1, D_MODEL), jnp.float32))
        per_layer["g2"].append(jnp.ones((1, D_MODEL), jnp.float32))
        per_layer["be2"].append(jnp.zeros((1, D_MODEL), jnp.float32))
    stacked = tuple(jnp.stack(per_layer[n], axis=0) for n in names)       # leading L dim

    fc_w = rnd((D_MODEL * SEQ_LEN, OUTPUT_DIC_SIZE))
    fc_b = rnd((1, OUTPUT_DIC_SIZE))
    # per-seq-position weight blocks, padded to 128 lanes for a lane-dense store
    fcw3 = jnp.pad(fc_w.reshape(SEQ_LEN, D_MODEL, OUTPUT_DIC_SIZE),
                   ((0, 0), (0, 0), (0, O_PAD - OUTPUT_DIC_SIZE)))
    fcb = jnp.pad(fc_b, ((0, 0), (0, O_PAD - OUTPUT_DIC_SIZE)))
    return emb_mat, stacked, fcw3, fcb


if __name__ == "__main__":
    key = jax.random.PRNGKey(0)
    k_tok, k_par = jax.random.split(key)

    # deterministic example inputs: tokens in [1, VOCAB), last 2 positions padded
    src = jax.random.randint(k_tok, (BATCH, SEQ_LEN), 1, VOCAB, dtype=jnp.int32)
    src = src.at[:, -2:].set(PAD_IDX)

    emb_mat, stacked, fcw3, fcb = init_params(k_par)
    pe = make_positional_encoding(5000, D_MODEL)

    fwd = jax.jit(transformer_classify_forward)
    out = jax.block_until_ready(fwd(src, emb_mat, pe, stacked, fcw3, fcb))
    assert out.shape == (BATCH, OUTPUT_DIC_SIZE)
    assert bool(jnp.all(jnp.isfinite(out)))
    print("KERNEL_OK")
</pallas_src>

<mosaic_0001>
module attributes {stable_mosaic.version = 11 : i64} {
  func.func @fused_forward_kernel(%arg0: memref<16x32xf32, #tpu.memory_space<vmem>>, %arg1: memref<16x32xf32, #tpu.memory_space<vmem>>, %arg2: memref<16x16xf32, #tpu.memory_space<vmem>>, %arg3: memref<2x32x96xf32, #tpu.memory_space<vmem>>, %arg4: memref<2x1x96xf32, #tpu.memory_space<vmem>>, %arg5: memref<2x32x32xf32, #tpu.memory_space<vmem>>, %arg6: memref<2x1x32xf32, #tpu.memory_space<vmem>>, %arg7: memref<2x32x64xf32, #tpu.memory_space<vmem>>, %arg8: memref<2x1x64xf32, #tpu.memory_space<vmem>>, %arg9: memref<2x64x32xf32, #tpu.memory_space<vmem>>, %arg10: memref<2x1x32xf32, #tpu.memory_space<vmem>>, %arg11: memref<2x1x32xf32, #tpu.memory_space<vmem>>, %arg12: memref<2x1x32xf32, #tpu.memory_space<vmem>>, %arg13: memref<2x1x32xf32, #tpu.memory_space<vmem>>, %arg14: memref<2x1x32xf32, #tpu.memory_space<vmem>>, %arg15: memref<8x32x128xf32, #tpu.memory_space<vmem>>, %arg16: memref<1x128xf32, #tpu.memory_space<vmem>>, %arg17: memref<2x128xf32, #tpu.memory_space<vmem>>) attributes {dimension_semantics = [], scalar_prefetch = 0 : i64, scratch_operands = 0 : i64, tpu.core_type = #tpu.core_type<tc>} {
    %c0 = arith.constant 0 : index
    %c0_0 = arith.constant 0 : index
    %0 = vector.load %arg0[%c0, %c0_0] : memref<16x32xf32, #tpu.memory_space<vmem>>, vector<16x32xf32>
    %c0_1 = arith.constant 0 : index
    %c0_2 = arith.constant 0 : index
    %1 = vector.load %arg1[%c0_1, %c0_2] : memref<16x32xf32, #tpu.memory_space<vmem>>, vector<16x32xf32>
    %2 = arith.addf %0, %1 : vector<16x32xf32>
    %c0_3 = arith.constant 0 : index
    %c0_4 = arith.constant 0 : index
    %3 = vector.load %arg2[%c0_3, %c0_4] : memref<16x16xf32, #tpu.memory_space<vmem>>, vector<16x16xf32>
    %c0_5 = arith.constant 0 : index
    %c0_6 = arith.constant 0 : index
    %c0_7 = arith.constant 0 : index
    %4 = vector.load %arg3[%c0_5, %c0_6, %c0_7] : memref<2x32x96xf32, #tpu.memory_space<vmem>>, vector<1x32x96xf32>
    %5 = vector.shape_cast %4 : vector<1x32x96xf32> to vector<32x96xf32>
    %c0_8 = arith.constant 0 : index
    %c0_9 = arith.constant 0 : index
    %c0_10 = arith.constant 0 : index
    %6 = vector.load %arg4[%c0_8, %c0_9, %c0_10] : memref<2x1x96xf32, #tpu.memory_space<vmem>>, vector<1x1x96xf32>
    %7 = vector.shape_cast %6 : vector<1x1x96xf32> to vector<1x96xf32>
    %c0_11 = arith.constant 0 : index
    %c0_12 = arith.constant 0 : index
    %c0_13 = arith.constant 0 : index
    %8 = vector.load %arg5[%c0_11, %c0_12, %c0_13] : memref<2x32x32xf32, #tpu.memory_space<vmem>>, vector<1x32x32xf32>
    %9 = vector.shape_cast %8 : vector<1x32x32xf32> to vector<32x32xf32>
    %c0_14 = arith.constant 0 : index
    %c0_15 = arith.constant 0 : index
    %c0_16 = arith.constant 0 : index
    %10 = vector.load %arg6[%c0_14, %c0_15, %c0_16] : memref<2x1x32xf32, #tpu.memory_space<vmem>>, vector<1x1x32xf32>
    %11 = vector.shape_cast %10 : vector<1x1x32xf32> to vector<1x32xf32>
    %c0_17 = arith.constant 0 : index
    %c0_18 = arith.constant 0 : index
    %c0_19 = arith.constant 0 : index
    %12 = vector.load %arg7[%c0_17, %c0_18, %c0_19] : memref<2x32x64xf32, #tpu.memory_space<vmem>>, vector<1x32x64xf32>
    %13 = vector.shape_cast %12 : vector<1x32x64xf32> to vector<32x64xf32>
    %c0_20 = arith.constant 0 : index
    %c0_21 = arith.constant 0 : index
    %c0_22 = arith.constant 0 : index
    %14 = vector.load %arg8[%c0_20, %c0_21, %c0_22] : memref<2x1x64xf32, #tpu.memory_space<vmem>>, vector<1x1x64xf32>
    %15 = vector.shape_cast %14 : vector<1x1x64xf32> to vector<1x64xf32>
    %c0_23 = arith.constant 0 : index
    %c0_24 = arith.constant 0 : index
    %c0_25 = arith.constant 0 : index
    %16 = vector.load %arg9[%c0_23, %c0_24, %c0_25] : memref<2x64x32xf32, #tpu.memory_space<vmem>>, vector<1x64x32xf32>
    %17 = vector.shape_cast %16 : vector<1x64x32xf32> to vector<64x32xf32>
    %c0_26 = arith.constant 0 : index
    %c0_27 = arith.constant 0 : index
    %c0_28 = arith.constant 0 : index
    %18 = vector.load %arg10[%c0_26, %c0_27, %c0_28] : memref<2x1x32xf32, #tpu.memory_space<vmem>>, vector<1x1x32xf32>
    %19 = vector.shape_cast %18 : vector<1x1x32xf32> to vector<1x32xf32>
    %c0_29 = arith.constant 0 : index
    %c0_30 = arith.constant 0 : index
    %c0_31 = arith.constant 0 : index
    %20 = vector.load %arg11[%c0_29, %c0_30, %c0_31] : memref<2x1x32xf32, #tpu.memory_space<vmem>>, vector<1x1x32xf32>
    %21 = vector.shape_cast %20 : vector<1x1x32xf32> to vector<1x32xf32>
    %c0_32 = arith.constant 0 : index
    %c0_33 = arith.constant 0 : index
    %c0_34 = arith.constant 0 : index
    %22 = vector.load %arg12[%c0_32, %c0_33, %c0_34] : memref<2x1x32xf32, #tpu.memory_space<vmem>>, vector<1x1x32xf32>
    %23 = vector.shape_cast %22 : vector<1x1x32xf32> to vector<1x32xf32>
    %c0_35 = arith.constant 0 : index
    %c0_36 = arith.constant 0 : index
    %c0_37 = arith.constant 0 : index
    %24 = vector.load %arg13[%c0_35, %c0_36, %c0_37] : memref<2x1x32xf32, #tpu.memory_space<vmem>>, vector<1x1x32xf32>
    %25 = vector.shape_cast %24 : vector<1x1x32xf32> to vector<1x32xf32>
    %c0_38 = arith.constant 0 : index
    %c0_39 = arith.constant 0 : index
    %c0_40 = arith.constant 0 : index
    %26 = vector.load %arg14[%c0_38, %c0_39, %c0_40] : memref<2x1x32xf32, #tpu.memory_space<vmem>>, vector<1x1x32xf32>
    %27 = vector.shape_cast %26 : vector<1x1x32xf32> to vector<1x32xf32>
    %cst = arith.constant dense<0.000000e+00> : vector<16x96xf32>
    %28 = tpu.matmul %2, %5, %cst {dimension_numbers = #tpu.dot_dimension_numbers<[1], [0], [0], [1], [0, 0, 1, 1], [], []>} : vector<16x32xf32>, vector<32x96xf32>, vector<16x96xf32> -> vector<16x96xf32>
    %29 = vector.broadcast %7 : vector<1x96xf32> to vector<16x96xf32>
    %30 = arith.addf %28, %29 : vector<16x96xf32>
    %31 = vector.extract_strided_slice %30 {offsets = [0, 0], sizes = [16, 32], strides = [1, 1]} : vector<16x96xf32> to vector<16x32xf32>
    %32 = vector.extract_strided_slice %30 {offsets = [0, 32], sizes = [16, 32], strides = [1, 1]} : vector<16x96xf32> to vector<16x32xf32>
    %33 = vector.extract_strided_slice %30 {offsets = [0, 64], sizes = [16, 32], strides = [1, 1]} : vector<16x96xf32> to vector<16x32xf32>
    %cst_41 = arith.constant 0.000000e+00 : f32
    %34 = vector.broadcast %cst_41 : f32 to vector<16x32xf32>
    %35 = vector.extract_strided_slice %31 {offsets = [0, 0], sizes = [16, 8], strides = [1, 1]} : vector<16x32xf32> to vector<16x8xf32>
    %36 = vector.extract_strided_slice %32 {offsets = [0, 0], sizes = [16, 8], strides = [1, 1]} : vector<16x32xf32> to vector<16x8xf32>
    %37 = vector.extract_strided_slice %33 {offsets = [0, 0], sizes = [16, 8], strides = [1, 1]} : vector<16x32xf32> to vector<16x8xf32>
    %cst_42 = arith.constant dense<0.000000e+00> : vector<16x16xf32>
    %38 = tpu.matmul %35, %36, %cst_42 {dimension_numbers = #tpu.dot_dimension_numbers<[1], [1], [0], [0], [0, 0, 1, 0], [], []>} : vector<16x8xf32>, vector<16x8xf32>, vector<16x16xf32> -> vector<16x16xf32>
    %cst_43 = arith.constant 0.353553385 : f32
    %39 = vector.broadcast %cst_43 : f32 to vector<16x16xf32>
    %40 = arith.mulf %38, %39 : vector<16x16xf32>
    %41 = arith.addf %40, %3 : vector<16x16xf32>
    %cst_44 = arith.constant dense<0xFF800000> : vector<16xf32>
    %42 = vector.multi_reduction <maximumf>, %41, %cst_44 [1] : vector<16x16xf32> to vector<16xf32>
    %43 = vector.shape_cast %42 : vector<16xf32> to vector<16x1xf32>
    %44 = vector.broadcast %43 : vector<16x1xf32> to vector<16x16xf32>
    %45 = arith.subf %41, %44 : vector<16x16xf32>
    %46 = math.exp %45 : vector<16x16xf32>
    %cst_45 = arith.constant dense<0.000000e+00> : vector<16xf32>
    %47 = vector.multi_reduction <add>, %46, %cst_45 [1] : vector<16x16xf32> to vector<16xf32>
    %48 = vector.shape_cast %47 : vector<16xf32> to vector<16x1xf32>
    %49 = tpu.reciprocal %48 {approx = true} : vector<16x1xf32> -> vector<16x1xf32>
    %50 = vector.broadcast %49 : vector<16x1xf32> to vector<16x16xf32>
    %51 = arith.mulf %46, %50 : vector<16x16xf32>
    %cst_46 = arith.constant dense<0.000000e+00> : vector<16x8xf32>
    %52 = tpu.matmul %51, %37, %cst_46 {dimension_numbers = #tpu.dot_dimension_numbers<[1], [0], [0], [1], [0, 0, 1, 1], [], []>} : vector<16x16xf32>, vector<16x8xf32>, vector<16x8xf32> -> vector<16x8xf32>
    %53 = vector.extract_strided_slice %9 {offsets = [0, 0], sizes = [8, 32], strides = [1, 1]} : vector<32x32xf32> to vector<8x32xf32>
    %cst_47 = arith.constant dense<0.000000e+00> : vector<16x32xf32>
    %54 = tpu.matmul %52, %53, %cst_47 {dimension_numbers = #tpu.dot_dimension_numbers<[1], [0], [0], [1], [0, 0, 1, 1], [], []>} : vector<16x8xf32>, vector<8x32xf32>, vector<16x32xf32> -> vector<16x32xf32>
    %55 = arith.addf %34, %54 : vector<16x32xf32>
    %56 = vector.extract_strided_slice %31 {offsets = [0, 8], sizes = [16, 8], strides = [1, 1]} : vector<16x32xf32> to vector<16x8xf32>
    %57 = vector.extract_strided_slice %32 {offsets = [0, 8], sizes = [16, 8], strides = [1, 1]} : vector<16x32xf32> to vector<16x8xf32>
    %58 = vector.extract_strided_slice %33 {offsets = [0, 8], sizes = [16, 8], strides = [1, 1]} : vector<16x32xf32> to vector<16x8xf32>
    %cst_48 = arith.constant dense<0.000000e+00> : vector<16x16xf32>
    %59 = tpu.matmul %56, %57, %cst_48 {dimension_numbers = #tpu.dot_dimension_numbers<[1], [1], [0], [0], [0, 0, 1, 0], [], []>} : vector<16x8xf32>, vector<16x8xf32>, vector<16x16xf32> -> vector<16x16xf32>
    %cst_49 = arith.constant 0.353553385 : f32
    %60 = vector.broadcast %cst_49 : f32 to vector<16x16xf32>
    %61 = arith.mulf %59, %60 : vector<16x16xf32>
    %62 = arith.addf %61, %3 : vector<16x16xf32>
    %cst_50 = arith.constant dense<0xFF800000> : vector<16xf32>
    %63 = vector.multi_reduction <maximumf>, %62, %cst_50 [1] : vector<16x16xf32> to vector<16xf32>
    %64 = vector.shape_cast %63 : vector<16xf32> to vector<16x1xf32>
    %65 = vector.broadcast %64 : vector<16x1xf32> to vector<16x16xf32>
    %66 = arith.subf %62, %65 : vector<16x16xf32>
    %67 = math.exp %66 : vector<16x16xf32>
    %cst_51 = arith.constant dense<0.000000e+00> : vector<16xf32>
    %68 = vector.multi_reduction <add>, %67, %cst_51 [1] : vector<16x16xf32> to vector<16xf32>
    %69 = vector.shape_cast %68 : vector<16xf32> to vector<16x1xf32>
    %70 = tpu.reciprocal %69 {approx = true} : vector<16x1xf32> -> vector<16x1xf32>
    %71 = vector.broadcast %70 : vector<16x1xf32> to vector<16x16xf32>
    %72 = arith.mulf %67, %71 : vector<16x16xf32>
    %cst_52 = arith.constant dense<0.000000e+00> : vector<16x8xf32>
    %73 = tpu.matmul %72, %58, %cst_52 {dimension_numbers = #tpu.dot_dimension_numbers<[1], [0], [0], [1], [0, 0, 1, 1], [], []>} : vector<16x16xf32>, vector<16x8xf32>, vector<16x8xf32> -> vector<16x8xf32>
    %74 = vector.extract_strided_slice %9 {offsets = [8, 0], sizes = [8, 32], strides = [1, 1]} : vector<32x32xf32> to vector<8x32xf32>
    %cst_53 = arith.constant dense<0.000000e+00> : vector<16x32xf32>
    %75 = tpu.matmul %73, %74, %cst_53 {dimension_numbers = #tpu.dot_dimension_numbers<[1], [0], [0], [1], [0, 0, 1, 1], [], []>} : vector<16x8xf32>, vector<8x32xf32>, vector<16x32xf32> -> vector<16x32xf32>
    %76 = arith.addf %55, %75 : vector<16x32xf32>
    %77 = vector.extract_strided_slice %31 {offsets = [0, 16], sizes = [16, 8], strides = [1, 1]} : vector<16x32xf32> to vector<16x8xf32>
    %78 = vector.extract_strided_slice %32 {offsets = [0, 16], sizes = [16, 8], strides = [1, 1]} : vector<16x32xf32> to vector<16x8xf32>
    %79 = vector.extract_strided_slice %33 {offsets = [0, 16], sizes = [16, 8], strides = [1, 1]} : vector<16x32xf32> to vector<16x8xf32>
    %cst_54 = arith.constant dense<0.000000e+00> : vector<16x16xf32>
    %80 = tpu.matmul %77, %78, %cst_54 {dimension_numbers = #tpu.dot_dimension_numbers<[1], [1], [0], [0], [0, 0, 1, 0], [], []>} : vector<16x8xf32>, vector<16x8xf32>, vector<16x16xf32> -> vector<16x16xf32>
    %cst_55 = arith.constant 0.353553385 : f32
    %81 = vector.broadcast %cst_55 : f32 to vector<16x16xf32>
    %82 = arith.mulf %80, %81 : vector<16x16xf32>
    %83 = arith.addf %82, %3 : vector<16x16xf32>
    %cst_56 = arith.constant dense<0xFF800000> : vector<16xf32>
    %84 = vector.multi_reduction <maximumf>, %83, %cst_56 [1] : vector<16x16xf32> to vector<16xf32>
    %85 = vector.shape_cast %84 : vector<16xf32> to vector<16x1xf32>
    %86 = vector.broadcast %85 : vector<16x1xf32> to vector<16x16xf32>
    %87 = arith.subf %83, %86 : vector<16x16xf32>
    %88 = math.exp %87 : vector<16x16xf32>
    %cst_57 = arith.constant dense<0.000000e+00> : vector<16xf32>
    %89 = vector.multi_reduction <add>, %88, %cst_57 [1] : vector<16x16xf32> to vector<16xf32>
    %90 = vector.shape_cast %89 : vector<16xf32> to vector<16x1xf32>
    %91 = tpu.reciprocal %90 {approx = true} : vector<16x1xf32> -> vector<16x1xf32>
    %92 = vector.broadcast %91 : vector<16x1xf32> to vector<16x16xf32>
    %93 = arith.mulf %88, %92 : vector<16x16xf32>
    %cst_58 = arith.constant dense<0.000000e+00> : vector<16x8xf32>
    %94 = tpu.matmul %93, %79, %cst_58 {dimension_numbers = #tpu.dot_dimension_numbers<[1], [0], [0], [1], [0, 0, 1, 1], [], []>} : vector<16x16xf32>, vector<16x8xf32>, vector<16x8xf32> -> vector<16x8xf32>
    %95 = vector.extract_strided_slice %9 {offsets = [16, 0], sizes = [8, 32], strides = [1, 1]} : vector<32x32xf32> to vector<8x32xf32>
    %cst_59 = arith.constant dense<0.000000e+00> : vector<16x32xf32>
    %96 = tpu.matmul %94, %95, %cst_59 {dimension_numbers = #tpu.dot_dimension_numbers<[1], [0], [0], [1], [0, 0, 1, 1], [], []>} : vector<16x8xf32>, vector<8x32xf32>, vector<16x32xf32> -> vector<16x32xf32>
    %97 = arith.addf %76, %96 : vector<16x32xf32>
    %98 = vector.extract_strided_slice %31 {offsets = [0, 24], sizes = [16, 8], strides = [1, 1]} : vector<16x32xf32> to vector<16x8xf32>
    %99 = vector.extract_strided_slice %32 {offsets = [0, 24], sizes = [16, 8], strides = [1, 1]} : vector<16x32xf32> to vector<16x8xf32>
    %100 = vector.extract_strided_slice %33 {offsets = [0, 24], sizes = [16, 8], strides = [1, 1]} : vector<16x32xf32> to vector<16x8xf32>
    %cst_60 = arith.constant dense<0.000000e+00> : vector<16x16xf32>
    %101 = tpu.matmul %98, %99, %cst_60 {dimension_numbers = #tpu.dot_dimension_numbers<[1], [1], [0], [0], [0, 0, 1, 0], [], []>} : vector<16x8xf32>, vector<16x8xf32>, vector<16x16xf32> -> vector<16x16xf32>
    %cst_61 = arith.constant 0.353553385 : f32
    %102 = vector.broadcast %cst_61 : f32 to vector<16x16xf32>
    %103 = arith.mulf %101, %102 : vector<16x16xf32>
    %104 = arith.addf %103, %3 : vector<16x16xf32>
    %cst_62 = arith.constant dense<0xFF800000> : vector<16xf32>
    %105 = vector.multi_reduction <maximumf>, %104, %cst_62 [1] : vector<16x16xf32> to vector<16xf32>
    %106 = vector.shape_cast %105 : vector<16xf32> to vector<16x1xf32>
    %107 = vector.broadcast %106 : vector<16x1xf32> to vector<16x16xf32>
    %108 = arith.subf %104, %107 : vector<16x16xf32>
    %109 = math.exp %108 : vector<16x16xf32>
    %cst_63 = arith.constant dense<0.000000e+00> : vector<16xf32>
    %110 = vector.multi_reduction <add>, %109, %cst_63 [1] : vector<16x16xf32> to vector<16xf32>
    %111 = vector.shape_cast %110 : vector<16xf32> to vector<16x1xf32>
    %112 = tpu.reciprocal %111 {approx = true} : vector<16x1xf32> -> vector<16x1xf32>
    %113 = vector.broadcast %112 : vector<16x1xf32> to vector<16x16xf32>
    %114 = arith.mulf %109, %113 : vector<16x16xf32>
    %cst_64 = arith.constant dense<0.000000e+00> : vector<16x8xf32>
    %115 = tpu.matmul %114, %100, %cst_64 {dimension_numbers = #tpu.dot_dimension_numbers<[1], [0], [0], [1], [0, 0, 1, 1], [], []>} : vector<16x16xf32>, vector<16x8xf32>, vector<16x8xf32> -> vector<16x8xf32>
    %116 = vector.extract_strided_slice %9 {offsets = [24, 0], sizes = [8, 32], strides = [1, 1]} : vector<32x32xf32> to vector<8x32xf32>
    %cst_65 = arith.constant dense<0.000000e+00> : vector<16x32xf32>
    %117 = tpu.matmul %115, %116, %cst_65 {dimension_numbers = #tpu.dot_dimension_numbers<[1], [0], [0], [1], [0, 0, 1, 1], [], []>} : vector<16x8xf32>, vector<8x32xf32>, vector<16x32xf32> -> vector<16x32xf32>
    %118 = arith.addf %97, %117 : vector<16x32xf32>
    %119 = vector.broadcast %11 : vector<1x32xf32> to vector<16x32xf32>
    %120 = arith.addf %118, %119 : vector<16x32xf32>
    %121 = arith.addf %2, %120 : vector<16x32xf32>
    %cst_66 = arith.constant dense<0.000000e+00> : vector<16xf32>
    %122 = vector.multi_reduction <add>, %121, %cst_66 [1] : vector<16x32xf32> to vector<16xf32>
    %123 = vector.shape_cast %122 : vector<16xf32> to vector<16x1xf32>
    %cst_67 = arith.constant 3.200000e+01 : f32
    %124 = vector.broadcast %cst_67 : f32 to vector<16x1xf32>
    %125 = arith.divf %123, %124 : vector<16x1xf32>
    %126 = vector.broadcast %125 : vector<16x1xf32> to vector<16x32xf32>
    %127 = arith.subf %121, %126 : vector<16x32xf32>
    %128 = arith.mulf %127, %127 : vector<16x32xf32>
    %cst_68 = arith.constant dense<0.000000e+00> : vector<16xf32>
    %129 = vector.multi_reduction <add>, %128, %cst_68 [1] : vector<16x32xf32> to vector<16xf32>
    %130 = vector.shape_cast %129 : vector<16xf32> to vector<16x1xf32>
    %cst_69 = arith.constant 3.200000e+01 : f32
    %131 = vector.broadcast %cst_69 : f32 to vector<16x1xf32>
    %132 = arith.divf %130, %131 : vector<16x1xf32>
    %133 = vector.broadcast %125 : vector<16x1xf32> to vector<16x32xf32>
    %134 = arith.subf %121, %133 : vector<16x32xf32>
    %cst_70 = arith.constant 9.99999974E-6 : f32
    %135 = vector.broadcast %cst_70 : f32 to vector<16x1xf32>
    %136 = arith.addf %132, %135 : vector<16x1xf32>
    %137 = math.rsqrt %136 : vector<16x1xf32>
    %138 = vector.broadcast %137 : vector<16x1xf32> to vector<16x32xf32>
    %139 = arith.mulf %134, %138 : vector<16x32xf32>
    %140 = vector.broadcast %21 : vector<1x32xf32> to vector<16x32xf32>
    %141 = arith.mulf %139, %140 : vector<16x32xf32>
    %142 = vector.broadcast %23 : vector<1x32xf32> to vector<16x32xf32>
    %143 = arith.addf %141, %142 : vector<16x32xf32>
    %cst_71 = arith.constant dense<0.000000e+00> : vector<16x64xf32>
    %144 = tpu.matmul %143, %13, %cst_71 {dimension_numbers = #tpu.dot_dimension_numbers<[1], [0], [0], [1], [0, 0, 1, 1], [], []>} : vector<16x32xf32>, vector<32x64xf32>, vector<16x64xf32> -> vector<16x64xf32>
    %145 = vector.broadcast %15 : vector<1x64xf32> to vector<16x64xf32>
    %146 = arith.addf %144, %145 : vector<16x64xf32>
    %cst_72 = arith.constant 0.000000e+00 : f32
    %147 = vector.broadcast %cst_72 : f32 to vector<16x64xf32>
    %148 = arith.maximumf %146, %147 : vector<16x64xf32>
    %cst_73 = arith.constant dense<0.000000e+00> : vector<16x32xf32>
    %149 = tpu.matmul %148, %17, %cst_73 {dimension_numbers = #tpu.dot_dimension_numbers<[1], [0], [0], [1], [0, 0, 1, 1], [], []>} : vector<16x64xf32>, vector<64x32xf32>, vector<16x32xf32> -> vector<16x32xf32>
    %150 = vector.broadcast %19 : vector<1x32xf32> to vector<16x32xf32>
    %151 = arith.addf %149, %150 : vector<16x32xf32>
    %152 = arith.addf %143, %151 : vector<16x32xf32>
    %cst_74 = arith.constant dense<0.000000e+00> : vector<16xf32>
    %153 = vector.multi_reduction <add>, %152, %cst_74 [1] : vector<16x32xf32> to vector<16xf32>
    %154 = vector.shape_cast %153 : vector<16xf32> to vector<16x1xf32>
    %cst_75 = arith.constant 3.200000e+01 : f32
    %155 = vector.broadcast %cst_75 : f32 to vector<16x1xf32>
    %156 = arith.divf %154, %155 : vector<16x1xf32>
    %157 = vector.broadcast %156 : vector<16x1xf32> to vector<16x32xf32>
    %158 = arith.subf %152, %157 : vector<16x32xf32>
    %159 = arith.mulf %158, %158 : vector<16x32xf32>
    %cst_76 = arith.constant dense<0.000000e+00> : vector<16xf32>
    %160 = vector.multi_reduction <add>, %159, %cst_76 [1] : vector<16x32xf32> to vector<16xf32>
    %161 = vector.shape_cast %160 : vector<16xf32> to vector<16x1xf32>
    %cst_77 = arith.constant 3.200000e+01 : f32
    %162 = vector.broadcast %cst_77 : f32 to vector<16x1xf32>
    %163 = arith.divf %161, %162 : vector<16x1xf32>
    %164 = vector.broadcast %156 : vector<16x1xf32> to vector<16x32xf32>
    %165 = arith.subf %152, %164 : vector<16x32xf32>
    %cst_78 = arith.constant 9.99999974E-6 : f32
    %166 = vector.broadcast %cst_78 : f32 to vector<16x1xf32>
    %167 = arith.addf %163, %166 : vector<16x1xf32>
    %168 = math.rsqrt %167 : vector<16x1xf32>
    %169 = vector.broadcast %168 : vector<16x1xf32> to vector<16x32xf32>
    %170 = arith.mulf %165, %169 : vector<16x32xf32>
    %171 = vector.broadcast %25 : vector<1x32xf32> to vector<16x32xf32>
    %172 = arith.mulf %170, %171 : vector<16x32xf32>
    %173 = vector.broadcast %27 : vector<1x32xf32> to vector<16x32xf32>
    %174 = arith.addf %172, %173 : vector<16x32xf32>
    %c1 = arith.constant 1 : index
    %c0_79 = arith.constant 0 : index
    %c0_80 = arith.constant 0 : index
    %175 = vector.load %arg3[%c1, %c0_79, %c0_80] : memref<2x32x96xf32, #tpu.memory_space<vmem>>, vector<1x32x96xf32>
    %176 = vector.shape_cast %175 : vector<1x32x96xf32> to vector<32x96xf32>
    %c1_81 = arith.constant 1 : index
    %c0_82 = arith.constant 0 : index
    %c0_83 = arith.constant 0 : index
    %177 = vector.load %arg4[%c1_81, %c0_82, %c0_83] : memref<2x1x96xf32, #tpu.memory_space<vmem>>, vector<1x1x96xf32>
    %178 = vector.shape_cast %177 : vector<1x1x96xf32> to vector<1x96xf32>
    %c1_84 = arith.constant 1 : index
    %c0_85 = arith.constant 0 : index
    %c0_86 = arith.constant 0 : index
    %179 = vector.load %arg5[%c1_84, %c0_85, %c0_86] : memref<2x32x32xf32, #tpu.memory_space<vmem>>, vector<1x32x32xf32>
    %180 = vector.shape_cast %179 : vector<1x32x32xf32> to vector<32x32xf32>
    %c1_87 = arith.constant 1 : index
    %c0_88 = arith.constant 0 : index
    %c0_89 = arith.constant 0 : index
    %181 = vector.load %arg6[%c1_87, %c0_88, %c0_89] : memref<2x1x32xf32, #tpu.memory_space<vmem>>, vector<1x1x32xf32>
    %182 = vector.shape_cast %181 : vector<1x1x32xf32> to vector<1x32xf32>
    %c1_90 = arith.constant 1 : index
    %c0_91 = arith.constant 0 : index
    %c0_92 = arith.constant 0 : index
    %183 = vector.load %arg7[%c1_90, %c0_91, %c0_92] : memref<2x32x64xf32, #tpu.memory_space<vmem>>, vector<1x32x64xf32>
    %184 = vector.shape_cast %183 : vector<1x32x64xf32> to vector<32x64xf32>
    %c1_93 = arith.constant 1 : index
    %c0_94 = arith.constant 0 : index
    %c0_95 = arith.constant 0 : index
    %185 = vector.load %arg8[%c1_93, %c0_94, %c0_95] : memref<2x1x64xf32, #tpu.memory_space<vmem>>, vector<1x1x64xf32>
    %186 = vector.shape_cast %185 : vector<1x1x64xf32> to vector<1x64xf32>
    %c1_96 = arith.constant 1 : index
    %c0_97 = arith.constant 0 : index
    %c0_98 = arith.constant 0 : index
    %187 = vector.load %arg9[%c1_96, %c0_97, %c0_98] : memref<2x64x32xf32, #tpu.memory_space<vmem>>, vector<1x64x32xf32>
    %188 = vector.shape_cast %187 : vector<1x64x32xf32> to vector<64x32xf32>
    %c1_99 = arith.constant 1 : index
    %c0_100 = arith.constant 0 : index
    %c0_101 = arith.constant 0 : index
    %189 = vector.load %arg10[%c1_99, %c0_100, %c0_101] : memref<2x1x32xf32, #tpu.memory_space<vmem>>, vector<1x1x32xf32>
    %190 = vector.shape_cast %189 : vector<1x1x32xf32> to vector<1x32xf32>
    %c1_102 = arith.constant 1 : index
    %c0_103 = arith.constant 0 : index
    %c0_104 = arith.constant 0 : index
    %191 = vector.load %arg11[%c1_102, %c0_103, %c0_104] : memref<2x1x32xf32, #tpu.memory_space<vmem>>, vector<1x1x32xf32>
    %192 = vector.shape_cast %191 : vector<1x1x32xf32> to vector<1x32xf32>
    %c1_105 = arith.constant 1 : index
    %c0_106 = arith.constant 0 : index
    %c0_107 = arith.constant 0 : index
    %193 = vector.load %arg12[%c1_105, %c0_106, %c0_107] : memref<2x1x32xf32, #tpu.memory_space<vmem>>, vector<1x1x32xf32>
    %194 = vector.shape_cast %193 : vector<1x1x32xf32> to vector<1x32xf32>
    %c1_108 = arith.constant 1 : index
    %c0_109 = arith.constant 0 : index
    %c0_110 = arith.constant 0 : index
    %195 = vector.load %arg13[%c1_108, %c0_109, %c0_110] : memref<2x1x32xf32, #tpu.memory_space<vmem>>, vector<1x1x32xf32>
    %196 = vector.shape_cast %195 : vector<1x1x32xf32> to vector<1x32xf32>
    %c1_111 = arith.constant 1 : index
    %c0_112 = arith.constant 0 : index
    %c0_113 = arith.constant 0 : index
    %197 = vector.load %arg14[%c1_111, %c0_112, %c0_113] : memref<2x1x32xf32, #tpu.memory_space<vmem>>, vector<1x1x32xf32>
    %198 = vector.shape_cast %197 : vector<1x1x32xf32> to vector<1x32xf32>
    %cst_114 = arith.constant dense<0.000000e+00> : vector<16x96xf32>
    %199 = tpu.matmul %174, %176, %cst_114 {dimension_numbers = #tpu.dot_dimension_numbers<[1], [0], [0], [1], [0, 0, 1, 1], [], []>} : vector<16x32xf32>, vector<32x96xf32>, vector<16x96xf32> -> vector<16x96xf32>
    %200 = vector.broadcast %178 : vector<1x96xf32> to vector<16x96xf32>
    %201 = arith.addf %199, %200 : vector<16x96xf32>
    %202 = vector.extract_strided_slice %201 {offsets = [0, 0], sizes = [16, 32], strides = [1, 1]} : vector<16x96xf32> to vector<16x32xf32>
    %203 = vector.extract_strided_slice %201 {offsets = [0, 32], sizes = [16, 32], strides = [1, 1]} : vector<16x96xf32> to vector<16x32xf32>
    %204 = vector.extract_strided_slice %201 {offsets = [0, 64], sizes = [16, 32], strides = [1, 1]} : vector<16x96xf32> to vector<16x32xf32>
    %cst_115 = arith.constant 0.000000e+00 : f32
    %205 = vector.broadcast %cst_115 : f32 to vector<16x32xf32>
    %206 = vector.extract_strided_slice %202 {offsets = [0, 0], sizes = [16, 8], strides = [1, 1]} : vector<16x32xf32> to vector<16x8xf32>
    %207 = vector.extract_strided_slice %203 {offsets = [0, 0], sizes = [16, 8], strides = [1, 1]} : vector<16x32xf32> to vector<16x8xf32>
    %208 = vector.extract_strided_slice %204 {offsets = [0, 0], sizes = [16, 8], strides = [1, 1]} : vector<16x32xf32> to vector<16x8xf32>
    %cst_116 = arith.constant dense<0.000000e+00> : vector<16x16xf32>
    %209 = tpu.matmul %206, %207, %cst_116 {dimension_numbers = #tpu.dot_dimension_numbers<[1], [1], [0], [0], [0, 0, 1, 0], [], []>} : vector<16x8xf32>, vector<16x8xf32>, vector<16x16xf32> -> vector<16x16xf32>
    %cst_117 = arith.constant 0.353553385 : f32
    %210 = vector.broadcast %cst_117 : f32 to vector<16x16xf32>
    %211 = arith.mulf %209, %210 : vector<16x16xf32>
    %212 = arith.addf %211, %3 : vector<16x16xf32>
    %cst_118 = arith.constant dense<0xFF800000> : vector<16xf32>
    %213 = vector.multi_reduction <maximumf>, %212, %cst_118 [1] : vector<16x16xf32> to vector<16xf32>
    %214 = vector.shape_cast %213 : vector<16xf32> to vector<16x1xf32>
    %215 = vector.broadcast %214 : vector<16x1xf32> to vector<16x16xf32>
    %216 = arith.subf %212, %215 : vector<16x16xf32>
    %217 = math.exp %216 : vector<16x16xf32>
    %cst_119 = arith.constant dense<0.000000e+00> : vector<16xf32>
    %218 = vector.multi_reduction <add>, %217, %cst_119 [1] : vector<16x16xf32> to vector<16xf32>
    %219 = vector.shape_cast %218 : vector<16xf32> to vector<16x1xf32>
    %220 = tpu.reciprocal %219 {approx = true} : vector<16x1xf32> -> vector<16x1xf32>
    %221 = vector.broadcast %220 : vector<16x1xf32> to vector<16x16xf32>
    %222 = arith.mulf %217, %221 : vector<16x16xf32>
    %cst_120 = arith.constant dense<0.000000e+00> : vector<16x8xf32>
    %223 = tpu.matmul %222, %208, %cst_120 {dimension_numbers = #tpu.dot_dimension_numbers<[1], [0], [0], [1], [0, 0, 1, 1], [], []>} : vector<16x16xf32>, vector<16x8xf32>, vector<16x8xf32> -> vector<16x8xf32>
    %224 = vector.extract_strided_slice %180 {offsets = [0, 0], sizes = [8, 32], strides = [1, 1]} : vector<32x32xf32> to vector<8x32xf32>
    %cst_121 = arith.constant dense<0.000000e+00> : vector<16x32xf32>
    %225 = tpu.matmul %223, %224, %cst_121 {dimension_numbers = #tpu.dot_dimension_numbers<[1], [0], [0], [1], [0, 0, 1, 1], [], []>} : vector<16x8xf32>, vector<8x32xf32>, vector<16x32xf32> -> vector<16x32xf32>
    %226 = arith.addf %205, %225 : vector<16x32xf32>
    %227 = vector.extract_strided_slice %202 {offsets = [0, 8], sizes = [16, 8], strides = [1, 1]} : vector<16x32xf32> to vector<16x8xf32>
    %228 = vector.extract_strided_slice %203 {offsets = [0, 8], sizes = [16, 8], strides = [1, 1]} : vector<16x32xf32> to vector<16x8xf32>
    %229 = vector.extract_strided_slice %204 {offsets = [0, 8], sizes = [16, 8], strides = [1, 1]} : vector<16x32xf32> to vector<16x8xf32>
    %cst_122 = arith.constant dense<0.000000e+00> : vector<16x16xf32>
    %230 = tpu.matmul %227, %228, %cst_122 {dimension_numbers = #tpu.dot_dimension_numbers<[1], [1], [0], [0], [0, 0, 1, 0], [], []>} : vector<16x8xf32>, vector<16x8xf32>, vector<16x16xf32> -> vector<16x16xf32>
    %cst_123 = arith.constant 0.353553385 : f32
    %231 = vector.broadcast %cst_123 : f32 to vector<16x16xf32>
    %232 = arith.mulf %230, %231 : vector<16x16xf32>
    %233 = arith.addf %232, %3 : vector<16x16xf32>
    %cst_124 = arith.constant dense<0xFF800000> : vector<16xf32>
    %234 = vector.multi_reduction <maximumf>, %233, %cst_124 [1] : vector<16x16xf32> to vector<16xf32>
    %235 = vector.shape_cast %234 : vector<16xf32> to vector<16x1xf32>
    %236 = vector.broadcast %235 : vector<16x1xf32> to vector<16x16xf32>
    %237 = arith.subf %233, %236 : vector<16x16xf32>
    %238 = math.exp %237 : vector<16x16xf32>
    %cst_125 = arith.constant dense<0.000000e+00> : vector<16xf32>
    %239 = vector.multi_reduction <add>, %238, %cst_125 [1] : vector<16x16xf32> to vector<16xf32>
    %240 = vector.shape_cast %239 : vector<16xf32> to vector<16x1xf32>
    %241 = tpu.reciprocal %240 {approx = true} : vector<16x1xf32> -> vector<16x1xf32>
    %242 = vector.broadcast %241 : vector<16x1xf32> to vector<16x16xf32>
    %243 = arith.mulf %238, %242 : vector<16x16xf32>
    %cst_126 = arith.constant dense<0.000000e+00> : vector<16x8xf32>
    %244 = tpu.matmul %243, %229, %cst_126 {dimension_numbers = #tpu.dot_dimension_numbers<[1], [0], [0], [1], [0, 0, 1, 1], [], []>} : vector<16x16xf32>, vector<16x8xf32>, vector<16x8xf32> -> vector<16x8xf32>
    %245 = vector.extract_strided_slice %180 {offsets = [8, 0], sizes = [8, 32], strides = [1, 1]} : vector<32x32xf32> to vector<8x32xf32>
    %cst_127 = arith.constant dense<0.000000e+00> : vector<16x32xf32>
    %246 = tpu.matmul %244, %245, %cst_127 {dimension_numbers = #tpu.dot_dimension_numbers<[1], [0], [0], [1], [0, 0, 1, 1], [], []>} : vector<16x8xf32>, vector<8x32xf32>, vector<16x32xf32> -> vector<16x32xf32>
    %247 = arith.addf %226, %246 : vector<16x32xf32>
    %248 = vector.extract_strided_slice %202 {offsets = [0, 16], sizes = [16, 8], strides = [1, 1]} : vector<16x32xf32> to vector<16x8xf32>
    %249 = vector.extract_strided_slice %203 {offsets = [0, 16], sizes = [16, 8], strides = [1, 1]} : vector<16x32xf32> to vector<16x8xf32>
    %250 = vector.extract_strided_slice %204 {offsets = [0, 16], sizes = [16, 8], strides = [1, 1]} : vector<16x32xf32> to vector<16x8xf32>
    %cst_128 = arith.constant dense<0.000000e+00> : vector<16x16xf32>
    %251 = tpu.matmul %248, %249, %cst_128 {dimension_numbers = #tpu.dot_dimension_numbers<[1], [1], [0], [0], [0, 0, 1, 0], [], []>} : vector<16x8xf32>, vector<16x8xf32>, vector<16x16xf32> -> vector<16x16xf32>
    %cst_129 = arith.constant 0.353553385 : f32
    %252 = vector.broadcast %cst_129 : f32 to vector<16x16xf32>
    %253 = arith.mulf %251, %252 : vector<16x16xf32>
    %254 = arith.addf %253, %3 : vector<16x16xf32>
    %cst_130 = arith.constant dense<0xFF800000> : vector<16xf32>
    %255 = vector.multi_reduction <maximumf>, %254, %cst_130 [1] : vector<16x16xf32> to vector<16xf32>
    %256 = vector.shape_cast %255 : vector<16xf32> to vector<16x1xf32>
    %257 = vector.broadcast %256 : vector<16x1xf32> to vector<16x16xf32>
    %258 = arith.subf %254, %257 : vector<16x16xf32>
    %259 = math.exp %258 : vector<16x16xf32>
    %cst_131 = arith.constant dense<0.000000e+00> : vector<16xf32>
    %260 = vector.multi_reduction <add>, %259, %cst_131 [1] : vector<16x16xf32> to vector<16xf32>
    %261 = vector.shape_cast %260 : vector<16xf32> to vector<16x1xf32>
    %262 = tpu.reciprocal %261 {approx = true} : vector<16x1xf32> -> vector<16x1xf32>
    %263 = vector.broadcast %262 : vector<16x1xf32> to vector<16x16xf32>
    %264 = arith.mulf %259, %263 : vector<16x16xf32>
    %cst_132 = arith.constant dense<0.000000e+00> : vector<16x8xf32>
    %265 = tpu.matmul %264, %250, %cst_132 {dimension_numbers = #tpu.dot_dimension_numbers<[1], [0], [0], [1], [0, 0, 1, 1], [], []>} : vector<16x16xf32>, vector<16x8xf32>, vector<16x8xf32> -> vector<16x8xf32>
    %266 = vector.extract_strided_slice %180 {offsets = [16, 0], sizes = [8, 32], strides = [1, 1]} : vector<32x32xf32> to vector<8x32xf32>
    %cst_133 = arith.constant dense<0.000000e+00> : vector<16x32xf32>
    %267 = tpu.matmul %265, %266, %cst_133 {dimension_numbers = #tpu.dot_dimension_numbers<[1], [0], [0], [1], [0, 0, 1, 1], [], []>} : vector<16x8xf32>, vector<8x32xf32>, vector<16x32xf32> -> vector<16x32xf32>
    %268 = arith.addf %247, %267 : vector<16x32xf32>
    %269 = vector.extract_strided_slice %202 {offsets = [0, 24], sizes = [16, 8], strides = [1, 1]} : vector<16x32xf32> to vector<16x8xf32>
    %270 = vector.extract_strided_slice %203 {offsets = [0, 24], sizes = [16, 8], strides = [1, 1]} : vector<16x32xf32> to vector<16x8xf32>
    %271 = vector.extract_strided_slice %204 {offsets = [0, 24], sizes = [16, 8], strides = [1, 1]} : vector<16x32xf32> to vector<16x8xf32>
    %cst_134 = arith.constant dense<0.000000e+00> : vector<16x16xf32>
    %272 = tpu.matmul %269, %270, %cst_134 {dimension_numbers = #tpu.dot_dimension_numbers<[1], [1], [0], [0], [0, 0, 1, 0], [], []>} : vector<16x8xf32>, vector<16x8xf32>, vector<16x16xf32> -> vector<16x16xf32>
    %cst_135 = arith.constant 0.353553385 : f32
    %273 = vector.broadcast %cst_135 : f32 to vector<16x16xf32>
    %274 = arith.mulf %272, %273 : vector<16x16xf32>
    %275 = arith.addf %274, %3 : vector<16x16xf32>
    %cst_136 = arith.constant dense<0xFF800000> : vector<16xf32>
    %276 = vector.multi_reduction <maximumf>, %275, %cst_136 [1] : vector<16x16xf32> to vector<16xf32>
    %277 = vector.shape_cast %276 : vector<16xf32> to vector<16x1xf32>
    %278 = vector.broadcast %277 : vector<16x1xf32> to vector<16x16xf32>
    %279 = arith.subf %275, %278 : vector<16x16xf32>
    %280 = math.exp %279 : vector<16x16xf32>
    %cst_137 = arith.constant dense<0.000000e+00> : vector<16xf32>
    %281 = vector.multi_reduction <add>, %280, %cst_137 [1] : vector<16x16xf32> to vector<16xf32>
    %282 = vector.shape_cast %281 : vector<16xf32> to vector<16x1xf32>
    %283 = tpu.reciprocal %282 {approx = true} : vector<16x1xf32> -> vector<16x1xf32>
    %284 = vector.broadcast %283 : vector<16x1xf32> to vector<16x16xf32>
    %285 = arith.mulf %280, %284 : vector<16x16xf32>
    %cst_138 = arith.constant dense<0.000000e+00> : vector<16x8xf32>
    %286 = tpu.matmul %285, %271, %cst_138 {dimension_numbers = #tpu.dot_dimension_numbers<[1], [0], [0], [1], [0, 0, 1, 1], [], []>} : vector<16x16xf32>, vector<16x8xf32>, vector<16x8xf32> -> vector<16x8xf32>
    %287 = vector.extract_strided_slice %180 {offsets = [24, 0], sizes = [8, 32], strides = [1, 1]} : vector<32x32xf32> to vector<8x32xf32>
    %cst_139 = arith.constant dense<0.000000e+00> : vector<16x32xf32>
    %288 = tpu.matmul %286, %287, %cst_139 {dimension_numbers = #tpu.dot_dimension_numbers<[1], [0], [0], [1], [0, 0, 1, 1], [], []>} : vector<16x8xf32>, vector<8x32xf32>, vector<16x32xf32> -> vector<16x32xf32>
    %289 = arith.addf %268, %288 : vector<16x32xf32>
    %290 = vector.broadcast %182 : vector<1x32xf32> to vector<16x32xf32>
    %291 = arith.addf %289, %290 : vector<16x32xf32>
    %292 = arith.addf %174, %291 : vector<16x32xf32>
    %cst_140 = arith.constant dense<0.000000e+00> : vector<16xf32>
    %293 = vector.multi_reduction <add>, %292, %cst_140 [1] : vector<16x32xf32> to vector<16xf32>
    %294 = vector.shape_cast %293 : vector<16xf32> to vector<16x1xf32>
    %cst_141 = arith.constant 3.200000e+01 : f32
    %295 = vector.broadcast %cst_141 : f32 to vector<16x1xf32>
    %296 = arith.divf %294, %295 : vector<16x1xf32>
    %297 = vector.broadcast %296 : vector<16x1xf32> to vector<16x32xf32>
    %298 = arith.subf %292, %297 : vector<16x32xf32>
    %299 = arith.mulf %298, %298 : vector<16x32xf32>
    %cst_142 = arith.constant dense<0.000000e+00> : vector<16xf32>
    %300 = vector.multi_reduction <add>, %299, %cst_142 [1] : vector<16x32xf32> to vector<16xf32>
    %301 = vector.shape_cast %300 : vector<16xf32> to vector<16x1xf32>
    %cst_143 = arith.constant 3.200000e+01 : f32
    %302 = vector.broadcast %cst_143 : f32 to vector<16x1xf32>
    %303 = arith.divf %301, %302 : vector<16x1xf32>
    %304 = vector.broadcast %296 : vector<16x1xf32> to vector<16x32xf32>
    %305 = arith.subf %292, %304 : vector<16x32xf32>
    %cst_144 = arith.constant 9.99999974E-6 : f32
    %306 = vector.broadcast %cst_144 : f32 to vector<16x1xf32>
    %307 = arith.addf %303, %306 : vector<16x1xf32>
    %308 = math.rsqrt %307 : vector<16x1xf32>
    %309 = vector.broadcast %308 : vector<16x1xf32> to vector<16x32xf32>
    %310 = arith.mulf %305, %309 : vector<16x32xf32>
    %311 = vector.broadcast %192 : vector<1x32xf32> to vector<16x32xf32>
    %312 = arith.mulf %310, %311 : vector<16x32xf32>
    %313 = vector.broadcast %194 : vector<1x32xf32> to vector<16x32xf32>
    %314 = arith.addf %312, %313 : vector<16x32xf32>
    %cst_145 = arith.constant dense<0.000000e+00> : vector<16x64xf32>
    %315 = tpu.matmul %314, %184, %cst_145 {dimension_numbers = #tpu.dot_dimension_numbers<[1], [0], [0], [1], [0, 0, 1, 1], [], []>} : vector<16x32xf32>, vector<32x64xf32>, vector<16x64xf32> -> vector<16x64xf32>
    %316 = vector.broadcast %186 : vector<1x64xf32> to vector<16x64xf32>
    %317 = arith.addf %315, %316 : vector<16x64xf32>
    %cst_146 = arith.constant 0.000000e+00 : f32
    %318 = vector.broadcast %cst_146 : f32 to vector<16x64xf32>
    %319 = arith.maximumf %317, %318 : vector<16x64xf32>
    %cst_147 = arith.constant dense<0.000000e+00> : vector<16x32xf32>
    %320 = tpu.matmul %319, %188, %cst_147 {dimension_numbers = #tpu.dot_dimension_numbers<[1], [0], [0], [1], [0, 0, 1, 1], [], []>} : vector<16x64xf32>, vector<64x32xf32>, vector<16x32xf32> -> vector<16x32xf32>
    %321 = vector.broadcast %190 : vector<1x32xf32> to vector<16x32xf32>
    %322 = arith.addf %320, %321 : vector<16x32xf32>
    %323 = arith.addf %314, %322 : vector<16x32xf32>
    %cst_148 = arith.constant dense<0.000000e+00> : vector<16xf32>
    %324 = vector.multi_reduction <add>, %323, %cst_148 [1] : vector<16x32xf32> to vector<16xf32>
    %325 = vector.shape_cast %324 : vector<16xf32> to vector<16x1xf32>
    %cst_149 = arith.constant 3.200000e+01 : f32
    %326 = vector.broadcast %cst_149 : f32 to vector<16x1xf32>
    %327 = arith.divf %325, %326 : vector<16x1xf32>
    %328 = vector.broadcast %327 : vector<16x1xf32> to vector<16x32xf32>
    %329 = arith.subf %323, %328 : vector<16x32xf32>
    %330 = arith.mulf %329, %329 : vector<16x32xf32>
    %cst_150 = arith.constant dense<0.000000e+00> : vector<16xf32>
    %331 = vector.multi_reduction <add>, %330, %cst_150 [1] : vector<16x32xf32> to vector<16xf32>
    %332 = vector.shape_cast %331 : vector<16xf32> to vector<16x1xf32>
    %cst_151 = arith.constant 3.200000e+01 : f32
    %333 = vector.broadcast %cst_151 : f32 to vector<16x1xf32>
    %334 = arith.divf %332, %333 : vector<16x1xf32>
    %335 = vector.broadcast %327 : vector<16x1xf32> to vector<16x32xf32>
    %336 = arith.subf %323, %335 : vector<16x32xf32>
    %cst_152 = arith.constant 9.99999974E-6 : f32
    %337 = vector.broadcast %cst_152 : f32 to vector<16x1xf32>
    %338 = arith.addf %334, %337 : vector<16x1xf32>
    %339 = math.rsqrt %338 : vector<16x1xf32>
    %340 = vector.broadcast %339 : vector<16x1xf32> to vector<16x32xf32>
    %341 = arith.mulf %336, %340 : vector<16x32xf32>
    %342 = vector.broadcast %196 : vector<1x32xf32> to vector<16x32xf32>
    %343 = arith.mulf %341, %342 : vector<16x32xf32>
    %344 = vector.broadcast %198 : vector<1x32xf32> to vector<16x32xf32>
    %345 = arith.addf %343, %344 : vector<16x32xf32>
    %346 = vector.shape_cast %345 : vector<16x32xf32> to vector<2x8x32xf32>
    %cst_153 = arith.constant 0.000000e+00 : f32
    %347 = vector.broadcast %cst_153 : f32 to vector<2x128xf32>
    %348 = vector.extract_strided_slice %346 {offsets = [0, 0, 0], sizes = [2, 1, 32], strides = [1, 1, 1]} : vector<2x8x32xf32> to vector<2x1x32xf32>
    %349 = vector.shape_cast %348 : vector<2x1x32xf32> to vector<2x32xf32>
    %c0_154 = arith.constant 0 : index
    %c0_155 = arith.constant 0 : index
    %c0_156 = arith.constant 0 : index
    %350 = vector.load %arg15[%c0_154, %c0_155, %c0_156] : memref<8x32x128xf32, #tpu.memory_space<vmem>>, vector<1x32x128xf32>
    %351 = vector.shape_cast %350 : vector<1x32x128xf32> to vector<32x128xf32>
    %cst_157 = arith.constant dense<0.000000e+00> : vector<2x128xf32>
    %352 = tpu.matmul %349, %351, %cst_157 {dimension_numbers = #tpu.dot_dimension_numbers<[1], [0], [0], [1], [0, 0, 1, 1], [], []>} : vector<2x32xf32>, vector<32x128xf32>, vector<2x128xf32> -> vector<2x128xf32>
    %353 = arith.addf %347, %352 : vector<2x128xf32>
    %354 = vector.extract_strided_slice %346 {offsets = [0, 1, 0], sizes = [2, 1, 32], strides = [1, 1, 1]} : vector<2x8x32xf32> to vector<2x1x32xf32>
    %355 = vector.shape_cast %354 : vector<2x1x32xf32> to vector<2x32xf32>
    %c1_158 = arith.constant 1 : index
    %c0_159 = arith.constant 0 : index
    %c0_160 = arith.constant 0 : index
    %356 = vector.load %arg15[%c1_158, %c0_159, %c0_160] : memref<8x32x128xf32, #tpu.memory_space<vmem>>, vector<1x32x128xf32>
    %357 = vector.shape_cast %356 : vector<1x32x128xf32> to vector<32x128xf32>
    %cst_161 = arith.constant dense<0.000000e+00> : vector<2x128xf32>
    %358 = tpu.matmul %355, %357, %cst_161 {dimension_numbers = #tpu.dot_dimension_numbers<[1], [0], [0], [1], [0, 0, 1, 1], [], []>} : vector<2x32xf32>, vector<32x128xf32>, vector<2x128xf32> -> vector<2x128xf32>
    %359 = arith.addf %353, %358 : vector<2x128xf32>
    %360 = vector.extract_strided_slice %346 {offsets = [0, 2, 0], sizes = [2, 1, 32], strides = [1, 1, 1]} : vector<2x8x32xf32> to vector<2x1x32xf32>
    %361 = vector.shape_cast %360 : vector<2x1x32xf32> to vector<2x32xf32>
    %c2 = arith.constant 2 : index
    %c0_162 = arith.constant 0 : index
    %c0_163 = arith.constant 0 : index
    %362 = vector.load %arg15[%c2, %c0_162, %c0_163] : memref<8x32x128xf32, #tpu.memory_space<vmem>>, vector<1x32x128xf32>
    %363 = vector.shape_cast %362 : vector<1x32x128xf32> to vector<32x128xf32>
    %cst_164 = arith.constant dense<0.000000e+00> : vector<2x128xf32>
    %364 = tpu.matmul %361, %363, %cst_164 {dimension_numbers = #tpu.dot_dimension_numbers<[1], [0], [0], [1], [0, 0, 1, 1], [], []>} : vector<2x32xf32>, vector<32x128xf32>, vector<2x128xf32> -> vector<2x128xf32>
    %365 = arith.addf %359, %364 : vector<2x128xf32>
    %366 = vector.extract_strided_slice %346 {offsets = [0, 3, 0], sizes = [2, 1, 32], strides = [1, 1, 1]} : vector<2x8x32xf32> to vector<2x1x32xf32>
    %367 = vector.shape_cast %366 : vector<2x1x32xf32> to vector<2x32xf32>
    %c3 = arith.constant 3 : index
    %c0_165 = arith.constant 0 : index
    %c0_166 = arith.constant 0 : index
    %368 = vector.load %arg15[%c3, %c0_165, %c0_166] : memref<8x32x128xf32, #tpu.memory_space<vmem>>, vector<1x32x128xf32>
    %369 = vector.shape_cast %368 : vector<1x32x128xf32> to vector<32x128xf32>
    %cst_167 = arith.constant dense<0.000000e+00> : vector<2x128xf32>
    %370 = tpu.matmul %367, %369, %cst_167 {dimension_numbers = #tpu.dot_dimension_numbers<[1], [0], [0], [1], [0, 0, 1, 1], [], []>} : vector<2x32xf32>, vector<32x128xf32>, vector<2x128xf32> -> vector<2x128xf32>
    %371 = arith.addf %365, %370 : vector<2x128xf32>
    %372 = vector.extract_strided_slice %346 {offsets = [0, 4, 0], sizes = [2, 1, 32], strides = [1, 1, 1]} : vector<2x8x32xf32> to vector<2x1x32xf32>
    %373 = vector.shape_cast %372 : vector<2x1x32xf32> to vector<2x32xf32>
    %c4 = arith.constant 4 : index
    %c0_168 = arith.constant 0 : index
    %c0_169 = arith.constant 0 : index
    %374 = vector.load %arg15[%c4, %c0_168, %c0_169] : memref<8x32x128xf32, #tpu.memory_space<vmem>>, vector<1x32x128xf32>
    %375 = vector.shape_cast %374 : vector<1x32x128xf32> to vector<32x128xf32>
    %cst_170 = arith.constant dense<0.000000e+00> : vector<2x128xf32>
    %376 = tpu.matmul %373, %375, %cst_170 {dimension_numbers = #tpu.dot_dimension_numbers<[1], [0], [0], [1], [0, 0, 1, 1], [], []>} : vector<2x32xf32>, vector<32x128xf32>, vector<2x128xf32> -> vector<2x128xf32>
    %377 = arith.addf %371, %376 : vector<2x128xf32>
    %378 = vector.extract_strided_slice %346 {offsets = [0, 5, 0], sizes = [2, 1, 32], strides = [1, 1, 1]} : vector<2x8x32xf32> to vector<2x1x32xf32>
    %379 = vector.shape_cast %378 : vector<2x1x32xf32> to vector<2x32xf32>
    %c5 = arith.constant 5 : index
    %c0_171 = arith.constant 0 : index
    %c0_172 = arith.constant 0 : index
    %380 = vector.load %arg15[%c5, %c0_171, %c0_172] : memref<8x32x128xf32, #tpu.memory_space<vmem>>, vector<1x32x128xf32>
    %381 = vector.shape_cast %380 : vector<1x32x128xf32> to vector<32x128xf32>
    %cst_173 = arith.constant dense<0.000000e+00> : vector<2x128xf32>
    %382 = tpu.matmul %379, %381, %cst_173 {dimension_numbers = #tpu.dot_dimension_numbers<[1], [0], [0], [1], [0, 0, 1, 1], [], []>} : vector<2x32xf32>, vector<32x128xf32>, vector<2x128xf32> -> vector<2x128xf32>
    %383 = arith.addf %377, %382 : vector<2x128xf32>
    %384 = vector.extract_strided_slice %346 {offsets = [0, 6, 0], sizes = [2, 1, 32], strides = [1, 1, 1]} : vector<2x8x32xf32> to vector<2x1x32xf32>
    %385 = vector.shape_cast %384 : vector<2x1x32xf32> to vector<2x32xf32>
    %c6 = arith.constant 6 : index
    %c0_174 = arith.constant 0 : index
    %c0_175 = arith.constant 0 : index
    %386 = vector.load %arg15[%c6, %c0_174, %c0_175] : memref<8x32x128xf32, #tpu.memory_space<vmem>>, vector<1x32x128xf32>
    %387 = vector.shape_cast %386 : vector<1x32x128xf32> to vector<32x128xf32>
    %cst_176 = arith.constant dense<0.000000e+00> : vector<2x128xf32>
    %388 = tpu.matmul %385, %387, %cst_176 {dimension_numbers = #tpu.dot_dimension_numbers<[1], [0], [0], [1], [0, 0, 1, 1], [], []>} : vector<2x32xf32>, vector<32x128xf32>, vector<2x128xf32> -> vector<2x128xf32>
    %389 = arith.addf %383, %388 : vector<2x128xf32>
    %390 = vector.extract_strided_slice %346 {offsets = [0, 7, 0], sizes = [2, 1, 32], strides = [1, 1, 1]} : vector<2x8x32xf32> to vector<2x1x32xf32>
    %391 = vector.shape_cast %390 : vector<2x1x32xf32> to vector<2x32xf32>
    %c7 = arith.constant 7 : index
    %c0_177 = arith.constant 0 : index
    %c0_178 = arith.constant 0 : index
    %392 = vector.load %arg15[%c7, %c0_177, %c0_178] : memref<8x32x128xf32, #tpu.memory_space<vmem>>, vector<1x32x128xf32>
    %393 = vector.shape_cast %392 : vector<1x32x128xf32> to vector<32x128xf32>
    %cst_179 = arith.constant dense<0.000000e+00> : vector<2x128xf32>
    %394 = tpu.matmul %391, %393, %cst_179 {dimension_numbers = #tpu.dot_dimension_numbers<[1], [0], [0], [1], [0, 0, 1, 1], [], []>} : vector<2x32xf32>, vector<32x128xf32>, vector<2x128xf32> -> vector<2x128xf32>
    %395 = arith.addf %389, %394 : vector<2x128xf32>
    %c0_180 = arith.constant 0 : index
    %c0_181 = arith.constant 0 : index
    %396 = vector.load %arg16[%c0_180, %c0_181] : memref<1x128xf32, #tpu.memory_space<vmem>>, vector<1x128xf32>
    %397 = vector.broadcast %396 : vector<1x128xf32> to vector<2x128xf32>
    %398 = arith.addf %395, %397 : vector<2x128xf32>
    %c0_182 = arith.constant 0 : index
    %c0_183 = arith.constant 0 : index
    %399 = vector.load %arg17[%c0_182, %c0_183] : memref<2x128xf32, #tpu.memory_space<vmem>>, vector<2x128xf32>
    tpu.vector_store %arg17[%c0_182, %c0_183], %398 {strides = array<i32>} : memref<2x128xf32, #tpu.memory_space<vmem>>, vector<2x128xf32>,
    return
  }
}

</mosaic_0001>

<llo_original>
// kernel: transformer_classify_forward.1
$region0: #{transformer_classify_forward.1}
  #allocation0 [shape = 'u32[]', space=smem, size = 0x4, offset = 0x4, fixed_abs, tag = 'smem constant byte address 0x4 - core index']
  #allocation1 [shape = 'u32[72,128]{1,0:T(1,128)}', space=vmem, size = 0x9000, scoped, tag = 'internal scratch']
  %s0 = inlined_call_operand.vmem [shape: f32[16,32], index: 0, kind: input, shape index: {}]
  %s1 = inlined_call_operand.vmem [shape: f32[16,32], index: 1, kind: input, shape index: {}]
  %s2 = inlined_call_operand.vmem [shape: f32[16,16], index: 2, kind: input, shape index: {}]
  %s3 = inlined_call_operand.vmem [shape: f32[2,32,96], index: 3, kind: input, shape index: {}]
  %s4 = inlined_call_operand.vmem [shape: f32[2,1,96], index: 4, kind: input, shape index: {}]
  %s5 = inlined_call_operand.vmem [shape: f32[2,32,32], index: 5, kind: input, shape index: {}]
  %s6 = inlined_call_operand.vmem [shape: f32[2,1,32], index: 6, kind: input, shape index: {}]
  %s7 = inlined_call_operand.hbm [shape: f32[2,32,64], index: 7, kind: input, shape index: {}]
  %s8 = inlined_call_operand.vmem [shape: f32[2,1,64], index: 8, kind: input, shape index: {}]
  %s9 = inlined_call_operand.vmem [shape: f32[2,64,32], index: 9, kind: input, shape index: {}]
  %s10 = inlined_call_operand.vmem [shape: f32[2,1,32], index: 10, kind: input, shape index: {}]
  %s11 = inlined_call_operand.vmem [shape: f32[2,1,32], index: 11, kind: input, shape index: {}]
  %s12 = inlined_call_operand.vmem [shape: f32[2,1,32], index: 12, kind: input, shape index: {}]
  %s13 = inlined_call_operand.vmem [shape: f32[2,1,32], index: 13, kind: input, shape index: {}]
  %s14 = inlined_call_operand.vmem [shape: f32[2,1,32], index: 14, kind: input, shape index: {}]
  %s15 = inlined_call_operand.vmem [shape: f32[8,32,128], index: 15, kind: input, shape index: {}]
  %s16 = inlined_call_operand.vmem [shape: f32[1,128], index: 16, kind: input, shape index: {}]
  %s17 = inlined_call_operand.hbm [shape: f32[2,128], index: 17, kind: output, shape index: {}]
  %s18 = sld [smem:[#allocation0]]
  $region82: #{transformer_classify_forward.1} parent=0
    _
  %s20 = ssub.s32 1, %s18
  %s21 = scalar_select 0, %s20, %s18
  $region1: #{transformer_classify_forward.1} parent=0
    #allocation2 [shape = 'u8[32768]{0}', space=vmem, size = 0x8000, scoped, tag = 'input window, operand 7, single buffered']
    #allocation3 [shape = 's32[1]{0}', space=sflag, size = 0x4, scoped, tag = 'scoped memory for transformer_classify_forward.1']
    #allocation4 [shape = 's32[1]{0}', space=sflag, size = 0x4, scoped, tag = 'scoped memory for transformer_classify_forward.1']
    #allocation5 [shape = 'u8[1024]{0}', space=vmem, size = 0x400, scoped, tag = 'output window, operand 0, single buffered']
    %22 = vsyncpa [#allocation3], 0
    %23 = vsyncpa [#allocation4], 0
    // Predicated region
    $region2: #{transformer_classify_forward.1} parent=1 // pred_check
      _
    $region3: #{transformer_classify_forward.1} parent=1 // pred_check_branch
      %25 = sbr.rel (0) target = $region5
    $region4: #{transformer_classify_forward.1} parent=1 // pred_region
      _
    $region5: #{transformer_classify_forward.1} parent=1 // pred_fallthru
      _
    // Predicated region
    $region6: #{transformer_classify_forward.1} parent=1 // pred_check
      _
    $region7: #{transformer_classify_forward.1} parent=1 // pred_check_branch
      %27 = sbr.rel (0) target = $region9
    $region8: #{transformer_classify_forward.1} parent=1 // pred_region
      _
    $region9: #{transformer_classify_forward.1} parent=1 // pred_fallthru
      _
    // Predicated region
    $region10: #{transformer_classify_forward.1} parent=1 // pred_check
      _
    $region11: #{transformer_classify_forward.1} parent=1 // pred_check_branch
      %29 = sbr.rel (0) target = $region13
    $region12: #{transformer_classify_forward.1} parent=1 // pred_region
      _
    $region13: #{transformer_classify_forward.1} parent=1 // pred_fallthru
      _
    // Predicated region
    $region14: #{transformer_classify_forward.1} parent=1 // pred_check
      _
    $region15: #{transformer_classify_forward.1} parent=1 // pred_check_branch
      %31 = sbr.rel (0) target = $region17
    $region16: #{transformer_classify_forward.1} parent=1 // pred_region
      _
    $region17: #{transformer_classify_forward.1} parent=1 // pred_fallthru
      _
    // Predicated region
    $region18: #{transformer_classify_forward.1} parent=1 // pred_check
      _
    $region19: #{transformer_classify_forward.1} parent=1 // pred_check_branch
      %33 = sbr.rel (0) target = $region21
    $region20: #{transformer_classify_forward.1} parent=1 // pred_region
      _
    $region21: #{transformer_classify_forward.1} parent=1 // pred_fallthru
      _
    // Predicated region
    $region22: #{transformer_classify_forward.1} parent=1 // pred_check
      _
    $region23: #{transformer_classify_forward.1} parent=1 // pred_check_branch
      %35 = sbr.rel (0) target = $region25
    $region24: #{transformer_classify_forward.1} parent=1 // pred_region
      _
    $region25: #{transformer_classify_forward.1} parent=1 // pred_fallthru
      _
    // Predicated region
    $region26: #{transformer_classify_forward.1} parent=1 // pred_check
      _
    $region27: #{transformer_classify_forward.1} parent=1 // pred_check_branch
      %37 = sbr.rel (0) target = $region29
    $region28: #{transformer_classify_forward.1} parent=1 // pred_region
      _
    $region29: #{transformer_classify_forward.1} parent=1 // pred_fallthru
      _
    // Predicated region
    $region30: #{transformer_classify_forward.1} parent=1 // pred_check
      _
    $region31: #{transformer_classify_forward.1} parent=1 // pred_check_branch
      %39 = sbr.rel (0) target = $region33
    $region32: #{transformer_classify_forward.1} parent=1 // pred_region
      %41 = vsyncadd [#allocation3], 0
      %s42 = sshll.u32 %s7, 4
      %s43 = int_to_ptr.hbm [resolvable:$true] %s42
      %s44 = sshll.u32 [#allocation2], 4
      %s45 = int_to_ptr.vmem [resolvable:$true] %s44
      %50 = dma.hbm_to_vmem [thread:$0]  %s43, 1024, %s45, [#allocation3], 128, 128, 8
    $region33: #{transformer_classify_forward.1} parent=1 // pred_fallthru
      _
    // Predicated region
    $region34: #{transformer_classify_forward.1} parent=1 // pred_check
      _
    $region35: #{transformer_classify_forward.1} parent=1 // pred_check_branch
      %52 = sbr.rel (0) target = $region37
    $region36: #{transformer_classify_forward.1} parent=1 // pred_region
      _
    $region37: #{transformer_classify_forward.1} parent=1 // pred_fallthru
      _
    // Predicated region
    $region38: #{transformer_classify_forward.1} parent=1 // pred_check
      _
    $region39: #{transformer_classify_forward.1} parent=1 // pred_check_branch
      %54 = sbr.rel (0) target = $region41
    $region40: #{transformer_classify_forward.1} parent=1 // pred_region
      _
    $region41: #{transformer_classify_forward.1} parent=1 // pred_fallthru
      _
    // Predicated region
    $region42: #{transformer_classify_forward.1} parent=1 // pred_check
      _
    $region43: #{transformer_classify_forward.1} parent=1 // pred_check_branch
      %56 = sbr.rel (0) target = $region45
    $region44: #{transformer_classify_forward.1} parent=1 // pred_region
      _
    $region45: #{transformer_classify_forward.1} parent=1 // pred_fallthru
      _
    // Predicated region
    $region46: #{transformer_classify_forward.1} parent=1 // pred_check
      _
    $region47: #{transformer_classify_forward.1} parent=1 // pred_check_branch
      %58 = sbr.rel (0) target = $region49
    $region48: #{transformer_classify_forward.1} parent=1 // pred_region
      _
    $region49: #{transformer_classify_forward.1} parent=1 // pred_fallthru
      _
    // Predicated region
    $region50: #{transformer_classify_forward.1} parent=1 // pred_check
      _
    $region51: #{transformer_classify_forward.1} parent=1 // pred_check_branch
      %60 = sbr.rel (0) target = $region53
    $region52: #{transformer_classify_forward.1} parent=1 // pred_region
      _
    $region53: #{transformer_classify_forward.1} parent=1 // pred_fallthru
      _
    // Predicated region
    $region54: #{transformer_classify_forward.1} parent=1 // pred_check
      _
    $region55: #{transformer_classify_forward.1} parent=1 // pred_check_branch
      %62 = sbr.rel (0) target = $region57
    $region56: #{transformer_classify_forward.1} parent=1 // pred_region
      _
    $region57: #{transformer_classify_forward.1} parent=1 // pred_fallthru
      _
    // Predicated region
    $region58: #{transformer_classify_forward.1} parent=1 // pred_check
      _
    $region59: #{transformer_classify_forward.1} parent=1 // pred_check_branch
      %64 = sbr.rel (0) target = $region61
    $region60: #{transformer_classify_forward.1} parent=1 // pred_region
      _
    $region61: #{transformer_classify_forward.1} parent=1 // pred_fallthru
      _
    // Predicated region
    $region62: #{transformer_classify_forward.1} parent=1 // pred_check
      _
    $region63: #{transformer_classify_forward.1} parent=1 // pred_check_branch
      %66 = sbr.rel (0) target = $region65
    $region64: #{transformer_classify_forward.1} parent=1 // pred_region
      _
    $region65: #{transformer_classify_forward.1} parent=1 // pred_fallthru
      _
    // Predicated region
    $region66: #{transformer_classify_forward.1} parent=1 // pred_check
      _
    $region67: #{transformer_classify_forward.1} parent=1 // pred_check_branch
      %68 = sbr.rel (0) target = $region69
    $region68: #{transformer_classify_forward.1} parent=1 // pred_region
      _
    $region69: #{transformer_classify_forward.1} parent=1 // pred_fallthru
      _
    // Predicated region
    $region70: #{transformer_classify_forward.1} parent=1 // pred_check
      _
    $region71: #{transformer_classify_forward.1} parent=1 // pred_check_branch
      %70 = sbr.rel (0) target = $region73
    $region72: #{transformer_classify_forward.1} parent=1 // pred_region
      %72 = dma.done [#allocation3], 1024
    $region73: #{transformer_classify_forward.1} parent=1 // pred_fallthru
      _
    %v73 = vld [vmem:[%s0] sm:$0xff]
    %v74 = vld [vmem:[%s0 + $0x8] sm:$0xff]
    %v75 = vld [vmem:[%s1] sm:$0xff]
    %v76 = vld [vmem:[%s1 + $0x8] sm:$0xff]
    %v77 = vadd.f32 %v73, %v75
    %v78 = vadd.f32 %v74, %v76
    %v79 = vld [vmem:[%s2] sm:$0xff]
    %v80 = vld [vmem:[%s2 + $0x8] sm:$0xff]
    %v81 = vld [vmem:[%s3] sm:$0xff]
    %v82 = vld [vmem:[%s3 + $0x8] sm:$0xff]
    %v83 = vld [vmem:[%s3 + $0x10] sm:$0xff]
    %v84 = vld [vmem:[%s3 + $0x18] sm:$0xff]
    %v85 = vld [vmem:[%s4] sm:$0x1]
    %v86 = vld [vmem:[%s5] sm:$0xff]
    %v87 = vld [vmem:[%s5 + $0x8] sm:$0xff]
    %v88 = vld [vmem:[%s5 + $0x10] sm:$0xff]
    %v89 = vld [vmem:[%s5 + $0x18] sm:$0xff]
    %v90 = vld [vmem:[%s6] sm:$0x1]
    %v91 = vld [vmem:[#allocation2] sm:$0xff]
    %v92 = vld [vmem:[#allocation2 + $0x8] sm:$0xff]
    %v93 = vld [vmem:[#allocation2 + $0x10] sm:$0xff]
    %v94 = vld [vmem:[#allocation2 + $0x18] sm:$0xff]
    %v95 = vld [vmem:[%s8] sm:$0x1]
    %v96 = vld [vmem:[%s9] sm:$0xff]
    %v97 = vld [vmem:[%s9 + $0x8] sm:$0xff]
    %v98 = vld [vmem:[%s9 + $0x10] sm:$0xff]
    %v99 = vld [vmem:[%s9 + $0x18] sm:$0xff]
    %v100 = vld [vmem:[%s9 + $0x20] sm:$0xff]
    %v101 = vld [vmem:[%s9 + $0x28] sm:$0xff]
    %v102 = vld [vmem:[%s9 + $0x30] sm:$0xff]
    %v103 = vld [vmem:[%s9 + $0x38] sm:$0xff]
    %v104 = vld [vmem:[%s10] sm:$0x1]
    %v105 = vld [vmem:[%s11] sm:$0x1]
    %v106 = vld [vmem:[%s12] sm:$0x1]
    %v107 = vld [vmem:[%s13] sm:$0x1]
    %v108 = vld [vmem:[%s14] sm:$0x1]
    %v110 = vperm.slane %v85, 0
    %vm112 = vcmask 261120
    %v114 = vsel %vm112, %v77, 0
    %v117 = vsel %vm112, %v78, 0
    %119 = vmatpush.msra.mxu0 0.0
    %120 = vmatpush.msra.mxu0 0.0
    %121 = vmatpush.msra.mxu0 0.0
    %122 = vmatpush.msra.mxu0 0.0
    %123 = vmatpush.msra.mxu0 0.0
    %124 = vmatpush.msra.mxu0 0.0
    %125 = vmatpush.msra.mxu0 0.0
    %126 = vmatpush.msra.mxu0 0.0
    %127 = vmatpush.msra.mxu0 0.0
    %128 = vmatpush.msra.mxu0 0.0
    %129 = vmatpush.msra.mxu0 0.0
    %130 = vmatpush.msra.mxu0 0.0
    %131 = vmatpush.msra.mxu0 %v84
    %132 = vmatpush.msra.mxu0 %v83
    %133 = vmatpush.msra.mxu0 %v82
    %134 = vmatpush.msra.mxu0 %v81
    %135 = vmatmul.f32.gmra.mxu0 %v114
    %v136 = vpop.f32.mrf.mxu0
    %v137 = vadd.f32 %v110, %v136
    %138 = vmatmul.f32.gmra.mxu0 %v117
    %v139 = vpop.f32.mrf.mxu0
    %v140 = vadd.f32 %v110, %v139
    %141 = vdwg.mxu0
    %144 = vrot.lane.b32.xlu0 %v137, 96
    %v145 = vpop.permute.xlu0 %144
    %146 = vrot.lane.b32.xlu0 %v140, 96
    %v147 = vpop.permute.xlu0 %146
    %vm148 = vcmask 64512
    %v149 = vsel %vm148, %v137, 0
    %v151 = vsel %vm148, %v140, 0
    %v153 = vsel %vm148, %v145, 0
    %v155 = vsel %vm148, %v147, 0
    %157 = vmatpush.xpose.msra.mxu0 0.0
    %158 = vmatpush.xpose.msra.mxu0 0.0
    %159 = vmatpush.xpose.msra.mxu0 0.0
    %160 = vmatpush.xpose.msra.mxu0 0.0
    %161 = vmatpush.xpose.msra.mxu0 0.0
    %162 = vmatpush.xpose.msra.mxu0 0.0
    %163 = vmatpush.xpose.msra.mxu0 0.0
    %164 = vmatpush.xpose.msra.mxu0 0.0
    %165 = vmatpush.xpose.msra.mxu0 0.0
    %166 = vmatpush.xpose.msra.mxu0 0.0
    %167 = vmatpush.xpose.msra.mxu0 0.0
    %168 = vmatpush.xpose.msra.mxu0 0.0
    %169 = vmatpush.xpose.msra.mxu0 0.0
    %170 = vmatpush.xpose.msra.mxu0 0.0
    %171 = vmatpush.xpose.msra.mxu0 %v155
    %172 = vmatpush.xpose.msra.mxu0 %v153
    %173 = vmatmul.f32.gmra.mxu0 %v149
    %v174 = vpop.f32.mrf.mxu0
    %v175 = vadd.f32 0.0, %v174
    %176 = vmatmul.f32.gmra.mxu0 %v151
    %v177 = vpop.f32.mrf.mxu0
    %v178 = vadd.f32 0.0, %v177
    %179 = vdwg.mxu0
    %v180 = vmul.f32 %v175, 0.35355338
    %v181 = vmul.f32 %v178, 0.35355338
    %v182 = vadd.f32 %v180, %v79
    %v183 = vadd.f32 %v181, %v80
    %vm184 = vcmask 130048
    %v185 = vsel %vm184, %v182, -inf
    %186 = vmax.xlane.f32.xlu0 %v185
    %v187 = vpop.xlane.xlu0 %186
    %v188 = vsel %vm184, %v183, -inf
    %189 = vmax.xlane.f32.xlu0 %v188
    %v190 = vpop.xlane.xlu0 %189
    %v191 = vsub.f32 %v182, %v187
    %v192 = vsub.f32 %v183, %v190
    %v193 = vmul.f32 %v191, 1.442695
    %v194 = vpow.pop %v193
    %v195 = vmul.f32 %v192, 1.442695
    %v196 = vpow.pop %v195
    %v197 = vsel %vm184, %v194, 0.0
    %198 = vadd.xlane.f32.xlu0 %v197
    %v199 = vpop.xlane.xlu0 %198
    %v200 = vsel %vm184, %v196, 0.0
    %201 = vadd.xlane.f32.xlu0 %v200
    %v202 = vpop.xlane.xlu0 %201
    %v203 = vrcp.pop %v199
    %v204 = vrcp.pop %v202
    %v205 = vmul.f32 %v194, %v203
    %v206 = vmul.f32 %v196, %v204
    %207 = vrot.lane.b32.xlu0 %v137, 64
    %v208 = vpop.permute.xlu0 %207
    %209 = vrot.lane.b32.xlu0 %v140, 64
    %v210 = vpop.permute.xlu0 %209
    %v214 = vsel %vm184, %v205, 0
    %v217 = vsel %vm184, %v206, 0
    %219 = vmatpush.msra.mxu0 0.0
    %220 = vmatpush.msra.mxu0 0.0
    %221 = vmatpush.msra.mxu0 0.0
    %222 = vmatpush.msra.mxu0 0.0
    %223 = vmatpush.msra.mxu0 0.0
    %224 = vmatpush.msra.mxu0 0.0
    %225 = vmatpush.msra.mxu0 0.0
    %226 = vmatpush.msra.mxu0 0.0
    %227 = vmatpush.msra.mxu0 0.0
    %228 = vmatpush.msra.mxu0 0.0
    %229 = vmatpush.msra.mxu0 0.0
    %230 = vmatpush.msra.mxu0 0.0
    %231 = vmatpush.msra.mxu0 0.0
    %232 = vmatpush.msra.mxu0 0.0
    %233 = vmatpush.msra.mxu0 %v210
    %234 = vmatpush.msra.mxu0 %v208
    %235 = vmatmul.f32.gmra.mxu0 %v214
    %v236 = vpop.f32.mrf.mxu0
    %v237 = vadd.f32 0.0, %v236
    %238 = vmatmul.f32.gmra.mxu0 %v217
    %v239 = vpop.f32.mrf.mxu0
    %v240 = vadd.f32 0.0, %v239
    %241 = vdwg.mxu0
    %242 = vrot.lane.b32.xlu0 %v137, 120
    %v243 = vpop.permute.xlu0 %242
    %244 = vrot.lane.b32.xlu0 %v140, 120
    %v245 = vpop.permute.xlu0 %244
    %246 = vrot.lane.b32.xlu0 %v137, 88
    %v247 = vpop.permute.xlu0 %246
    %248 = vrot.lane.b32.xlu0 %v140, 88
    %v249 = vpop.permute.xlu0 %248
    %v250 = vsel %vm148, %v243, 0
    %v252 = vsel %vm148, %v245, 0
    %v254 = vsel %vm148, %v247, 0
    %v256 = vsel %vm148, %v249, 0
    %258 = vmatpush.xpose.msra.mxu0 0.0
    %259 = vmatpush.xpose.msra.mxu0 0.0
    %260 = vmatpush.xpose.msra.mxu0 0.0
    %261 = vmatpush.xpose.msra.mxu0 0.0
    %262 = vmatpush.xpose.msra.mxu0 0.0
    %263 = vmatpush.xpose.msra.mxu0 0.0
    %264 = vmatpush.xpose.msra.mxu0 0.0
    %265 = vmatpush.xpose.msra.mxu0 0.0
    %266 = vmatpush.xpose.msra.mxu0 0.0
    %267 = vmatpush.xpose.msra.mxu0 0.0
    %268 = vmatpush.xpose.msra.mxu0 0.0
    %269 = vmatpush.xpose.msra.mxu0 0.0
    %270 = vmatpush.xpose.msra.mxu0 0.0
    %271 = vmatpush.xpose.msra.mxu0 0.0
    %272 = vmatpush.xpose.msra.mxu0 %v256
    %273 = vmatpush.xpose.msra.mxu0 %v254
    %274 = vmatmul.f32.gmra.mxu0 %v250
    %v275 = vpop.f32.mrf.mxu0
    %v276 = vadd.f32 0.0, %v275
    %277 = vmatmul.f32.gmra.mxu0 %v252
    %v278 = vpop.f32.mrf.mxu0
    %v279 = vadd.f32 0.0, %v278
    %280 = vdwg.mxu0
    %v281 = vmul.f32 %v276, 0.35355338
    %v282 = vmul.f32 %v279, 0.35355338
    %v283 = vadd.f32 %v281, %v79
    %v284 = vadd.f32 %v282, %v80
    %v285 = vsel %vm184, %v283, -inf
    %286 = vmax.xlane.f32.xlu0 %v285
    %v287 = vpop.xlane.xlu0 %286
    %v288 = vsel %vm184, %v284, -inf
    %289 = vmax.xlane.f32.xlu0 %v288
    %v290 = vpop.xlane.xlu0 %289
    %v291 = vsub.f32 %v283, %v287
    %v292 = vsub.f32 %v284, %v290
    %v293 = vmul.f32 %v291, 1.442695
    %v294 = vpow.pop %v293
    %v295 = vmul.f32 %v292, 1.442695
    %v296 = vpow.pop %v295
    %v297 = vsel %vm184, %v294, 0.0
    %298 = vadd.xlane.f32.xlu0 %v297
    %v299 = vpop.xlane.xlu0 %298
    %v300 = vsel %vm184, %v296, 0.0
    %301 = vadd.xlane.f32.xlu0 %v300
    %v302 = vpop.xlane.xlu0 %301
    %v303 = vrcp.pop %v299
    %v304 = vrcp.pop %v302
    %v305 = vmul.f32 %v294, %v303
    %v306 = vmul.f32 %v296, %v304
    %307 = vrot.lane.b32.xlu0 %v137, 56
    %v308 = vpop.permute.xlu0 %307
    %309 = vrot.lane.b32.xlu0 %v140, 56
    %v310 = vpop.permute.xlu0 %309
    %v314 = vsel %vm184, %v305, 0
    %v317 = vsel %vm184, %v306, 0
    %319 = vmatpush.msra.mxu0 0.0
    %320 = vmatpush.msra.mxu0 0.0
    %321 = vmatpush.msra.mxu0 0.0
    %322 = vmatpush.msra.mxu0 0.0
    %323 = vmatpush.msra.mxu0 0.0
    %324 = vmatpush.msra.mxu0 0.0
    %325 = vmatpush.msra.mxu0 0.0
    %326 = vmatpush.msra.mxu0 0.0
    %327 = vmatpush.msra.mxu0 0.0
    %328 = vmatpush.msra.mxu0 0.0
    %329 = vmatpush.msra.mxu0 0.0
    %330 = vmatpush.msra.mxu0 0.0
    %331 = vmatpush.msra.mxu0 0.0
    %332 = vmatpush.msra.mxu0 0.0
    %333 = vmatpush.msra.mxu0 %v310
    %334 = vmatpush.msra.mxu0 %v308
    %335 = vmatmul.f32.gmra.mxu0 %v314
    %v336 = vpop.f32.mrf.mxu0
    %v337 = vadd.f32 0.0, %v336
    %338 = vmatmul.f32.gmra.mxu0 %v317
    %v339 = vpop.f32.mrf.mxu0
    %v340 = vadd.f32 0.0, %v339
    %341 = vdwg.mxu0
    %v343 = vsel %vm148, %v337, 0
    %v346 = vsel %vm148, %v340, 0
    %348 = vmatpush.msra.mxu0 0.0
    %349 = vmatpush.msra.mxu0 0.0
    %350 = vmatpush.msra.mxu0 0.0
    %351 = vmatpush.msra.mxu0 0.0
    %352 = vmatpush.msra.mxu0 0.0
    %353 = vmatpush.msra.mxu0 0.0
    %354 = vmatpush.msra.mxu0 0.0
    %355 = vmatpush.msra.mxu0 0.0
    %356 = vmatpush.msra.mxu0 0.0
    %357 = vmatpush.msra.mxu0 0.0
    %358 = vmatpush.msra.mxu0 0.0
    %359 = vmatpush.msra.mxu0 0.0
    %360 = vmatpush.msra.mxu0 0.0
    %361 = vmatpush.msra.mxu0 0.0
    %362 = vmatpush.msra.mxu0 0.0
    %363 = vmatpush.msra.mxu0 %v87
    %364 = vmatmul.f32.gmra.mxu0 %v343
    %v365 = vpop.f32.mrf.mxu0
    %v366 = vadd.f32 0.0, %v365
    %367 = vmatmul.f32.gmra.mxu0 %v346
    %v368 = vpop.f32.mrf.mxu0
    %v369 = vadd.f32 0.0, %v368
    %370 = vdwg.mxu0
    %v372 = vsel %vm148, %v237, 0
    %v375 = vsel %vm148, %v240, 0
    %377 = vmatpush.msra.mxu0 0.0
    %378 = vmatpush.msra.mxu0 0.0
    %379 = vmatpush.msra.mxu0 0.0
    %380 = vmatpush.msra.mxu0 0.0
    %381 = vmatpush.msra.mxu0 0.0
    %382 = vmatpush.msra.mxu0 0.0
    %383 = vmatpush.msra.mxu0 0.0
    %384 = vmatpush.msra.mxu0 0.0
    %385 = vmatpush.msra.mxu0 0.0
    %386 = vmatpush.msra.mxu0 0.0
    %387 = vmatpush.msra.mxu0 0.0
    %388 = vmatpush.msra.mxu0 0.0
    %389 = vmatpush.msra.mxu0 0.0
    %390 = vmatpush.msra.mxu0 0.0
    %391 = vmatpush.msra.mxu0 0.0
    %392 = vmatpush.msra.mxu0 %v86
    %393 = vmatmul.f32.gmra.mxu0 %v372
    %v394 = vpop.f32.mrf.mxu0
    %v395 = vadd.f32 %v366, %v394
    %396 = vmatmul.f32.gmra.mxu0 %v375
    %v397 = vpop.f32.mrf.mxu0
    %v398 = vadd.f32 %v369, %v397
    %399 = vdwg.mxu0
    %400 = vrot.lane.b32.xlu0 %v137, 112
    %v401 = vpop.permute.xlu0 %400
    %402 = vrot.lane.b32.xlu0 %v140, 112
    %v403 = vpop.permute.xlu0 %402
    %404 = vrot.lane.b32.xlu0 %v137, 80
    %v405 = vpop.permute.xlu0 %404
    %406 = vrot.lane.b32.xlu0 %v140, 80
    %v407 = vpop.permute.xlu0 %406
    %v408 = vsel %vm148, %v401, 0
    %v410 = vsel %vm148, %v403, 0
    %v412 = vsel %vm148, %v405, 0
    %v414 = vsel %vm148, %v407, 0
    %416 = vmatpush.xpose.msra.mxu0 0.0
    %417 = vmatpush.xpose.msra.mxu0 0.0
    %418 = vmatpush.xpose.msra.mxu0 0.0
    %419 = vmatpush.xpose.msra.mxu0 0.0
    %420 = vmatpush.xpose.msra.mxu0 0.0
    %421 = vmatpush.xpose.msra.mxu0 0.0
    %422 = vmatpush.xpose.msra.mxu0 0.0
    %423 = vmatpush.xpose.msra.mxu0 0.0
    %424 = vmatpush.xpose.msra.mxu0 0.0
    %425 = vmatpush.xpose.msra.mxu0 0.0
    %426 = vmatpush.xpose.msra.mxu0 0.0
    %427 = vmatpush.xpose.msra.mxu0 0.0
    %428 = vmatpush.xpose.msra.mxu0 0.0
    %429 = vmatpush.xpose.msra.mxu0 0.0
    %430 = vmatpush.xpose.msra.mxu0 %v414
    %431 = vmatpush.xpose.msra.mxu0 %v412
    %432 = vmatmul.f32.gmra.mxu0 %v408
    %v433 = vpop.f32.mrf.mxu0
    %v434 = vadd.f32 0.0, %v433
    %435 = vmatmul.f32.gmra.mxu0 %v410
    %v436 = vpop.f32.mrf.mxu0
    %v437 = vadd.f32 0.0, %v436
    %438 = vdwg.mxu0
    %v439 = vmul.f32 %v434, 0.35355338
    %v440 = vmul.f32 %v437, 0.35355338
    %v441 = vadd.f32 %v439, %v79
    %v442 = vadd.f32 %v440, %v80
    %v443 = vsel %vm184, %v441, -inf
    %444 = vmax.xlane.f32.xlu0 %v443
    %v445 = vpop.xlane.xlu0 %444
    %v446 = vsel %vm184, %v442, -inf
    %447 = vmax.xlane.f32.xlu0 %v446
    %v448 = vpop.xlane.xlu0 %447
    %v449 = vsub.f32 %v441, %v445
    %v450 = vsub.f32 %v442, %v448
    %v451 = vmul.f32 %v449, 1.442695
    %v452 = vpow.pop %v451
    %v453 = vmul.f32 %v450, 1.442695
    %v454 = vpow.pop %v453
    %v455 = vsel %vm184, %v452, 0.0
    %456 = vadd.xlane.f32.xlu0 %v455
    %v457 = vpop.xlane.xlu0 %456
    %v458 = vsel %vm184, %v454, 0.0
    %459 = vadd.xlane.f32.xlu0 %v458
    %v460 = vpop.xlane.xlu0 %459
    %v461 = vrcp.pop %v457
    %v462 = vrcp.pop %v460
    %v463 = vmul.f32 %v452, %v461
    %v464 = vmul.f32 %v454, %v462
    %465 = vrot.lane.b32.xlu0 %v137, 48
    %v466 = vpop.permute.xlu0 %465
    %467 = vrot.lane.b32.xlu0 %v140, 48
    %v468 = vpop.permute.xlu0 %467
    %v472 = vsel %vm184, %v463, 0
    %v475 = vsel %vm184, %v464, 0
    %477 = vmatpush.msra.mxu0 0.0
    %478 = vmatpush.msra.mxu0 0.0
    %479 = vmatpush.msra.mxu0 0.0
    %480 = vmatpush.msra.mxu0 0.0
    %481 = vmatpush.msra.mxu0 0.0
    %482 = vmatpush.msra.mxu0 0.0
    %483 = vmatpush.msra.mxu0 0.0
    %484 = vmatpush.msra.mxu0 0.0
    %485 = vmatpush.msra.mxu0 0.0
    %486 = vmatpush.msra.mxu0 0.0
    %487 = vmatpush.msra.mxu0 0.0
    %488 = vmatpush.msra.mxu0 0.0
    %489 = vmatpush.msra.mxu0 0.0
    %490 = vmatpush.msra.mxu0 0.0
    %491 = vmatpush.msra.mxu0 %v468
    %492 = vmatpush.msra.mxu0 %v466
    %493 = vmatmul.f32.gmra.mxu0 %v472
    %v494 = vpop.f32.mrf.mxu0
    %v495 = vadd.f32 0.0, %v494
    %496 = vmatmul.f32.gmra.mxu0 %v475
    %v497 = vpop.f32.mrf.mxu0
    %v498 = vadd.f32 0.0, %v497
    %499 = vdwg.mxu0
    %v501 = vsel %vm148, %v495, 0
    %v504 = vsel %vm148, %v498, 0
    %506 = vmatpush.msra.mxu0 0.0
    %507 = vmatpush.msra.mxu0 0.0
    %508 = vmatpush.msra.mxu0 0.0
    %509 = vmatpush.msra.mxu0 0.0
    %510 = vmatpush.msra.mxu0 0.0
    %511 = vmatpush.msra.mxu0 0.0
    %512 = vmatpush.msra.mxu0 0.0
    %513 = vmatpush.msra.mxu0 0.0
    %514 = vmatpush.msra.mxu0 0.0
    %515 = vmatpush.msra.mxu0 0.0
    %516 = vmatpush.msra.mxu0 0.0
    %517 = vmatpush.msra.mxu0 0.0
    %518 = vmatpush.msra.mxu0 0.0
    %519 = vmatpush.msra.mxu0 0.0
    %520 = vmatpush.msra.mxu0 0.0
    %521 = vmatpush.msra.mxu0 %v88
    %522 = vmatmul.f32.gmra.mxu0 %v501
    %v523 = vpop.f32.mrf.mxu0
    %v524 = vadd.f32 0.0, %v523
    %525 = vmatmul.f32.gmra.mxu0 %v504
    %v526 = vpop.f32.mrf.mxu0
    %v527 = vadd.f32 0.0, %v526
    %528 = vdwg.mxu0
    %v529 = vadd.f32 %v395, %v524
    %v530 = vadd.f32 %v398, %v527
    %531 = vrot.lane.b32.xlu0 %v137, 104
    %v532 = vpop.permute.xlu0 %531
    %533 = vrot.lane.b32.xlu0 %v140, 104
    %v534 = vpop.permute.xlu0 %533
    %535 = vrot.lane.b32.xlu0 %v137, 72
    %v536 = vpop.permute.xlu0 %535
    %537 = vrot.lane.b32.xlu0 %v140, 72
    %v538 = vpop.permute.xlu0 %537
    %v539 = vsel %vm148, %v532, 0
    %v541 = vsel %vm148, %v534, 0
    %v543 = vsel %vm148, %v536, 0
    %v545 = vsel %vm148, %v538, 0
    %547 = vmatpush.xpose.msra.mxu0 0.0
    %548 = vmatpush.xpose.msra.mxu0 0.0
    %549 = vmatpush.xpose.msra.mxu0 0.0
    %550 = vmatpush.xpose.msra.mxu0 0.0
    %551 = vmatpush.xpose.msra.mxu0 0.0
    %552 = vmatpush.xpose.msra.mxu0 0.0
    %553 = vmatpush.xpose.msra.mxu0 0.0
    %554 = vmatpush.xpose.msra.mxu0 0.0
    %555 = vmatpush.xpose.msra.mxu0 0.0
    %556 = vmatpush.xpose.msra.mxu0 0.0
    %557 = vmatpush.xpose.msra.mxu0 0.0
    %558 = vmatpush.xpose.msra.mxu0 0.0
    %559 = vmatpush.xpose.msra.mxu0 0.0
    %560 = vmatpush.xpose.msra.mxu0 0.0
    %561 = vmatpush.xpose.msra.mxu0 %v545
    %562 = vmatpush.xpose.msra.mxu0 %v543
    %563 = vmatmul.f32.gmra.mxu0 %v539
    %v564 = vpop.f32.mrf.mxu0
    %v565 = vadd.f32 0.0, %v564
    %566 = vmatmul.f32.gmra.mxu0 %v541
    %v567 = vpop.f32.mrf.mxu0
    %v568 = vadd.f32 0.0, %v567
    %569 = vdwg.mxu0
    %v570 = vmul.f32 %v565, 0.35355338
    %v571 = vmul.f32 %v568, 0.35355338
    %v572 = vadd.f32 %v570, %v79
    %v573 = vadd.f32 %v571, %v80
    %v574 = vsel %vm184, %v572, -inf
    %575 = vmax.xlane.f32.xlu0 %v574
    %v576 = vpop.xlane.xlu0 %575
    %v577 = vsel %vm184, %v573, -inf
    %578 = vmax.xlane.f32.xlu0 %v577
    %v579 = vpop.xlane.xlu0 %578
    %v580 = vsub.f32 %v572, %v576
    %v581 = vsub.f32 %v573, %v579
    %v582 = vmul.f32 %v580, 1.442695
    %v583 = vpow.pop %v582
    %v584 = vmul.f32 %v581, 1.442695
    %v585 = vpow.pop %v584
    %v586 = vsel %vm184, %v583, 0.0
    %587 = vadd.xlane.f32.xlu0 %v586
    %v588 = vpop.xlane.xlu0 %587
    %v589 = vsel %vm184, %v585, 0.0
    %590 = vadd.xlane.f32.xlu0 %v589
    %v591 = vpop.xlane.xlu0 %590
    %v592 = vrcp.pop %v588
    %v593 = vrcp.pop %v591
    %v594 = vmul.f32 %v583, %v592
    %v595 = vmul.f32 %v585, %v593
    %596 = vrot.lane.b32.xlu0 %v137, 40
    %v597 = vpop.permute.xlu0 %596
    %598 = vrot.lane.b32.xlu0 %v140, 40
    %v599 = vpop.permute.xlu0 %598
    %v603 = vsel %vm184, %v594, 0
    %v606 = vsel %vm184, %v595, 0
    %608 = vmatpush.msra.mxu0 0.0
    %609 = vmatpush.msra.mxu0 0.0
    %610 = vmatpush.msra.mxu0 0.0
    %611 = vmatpush.msra.mxu0 0.0
    %612 = vmatpush.msra.mxu0 0.0
    %613 = vmatpush.msra.mxu0 0.0
    %614 = vmatpush.msra.mxu0 0.0
    %615 = vmatpush.msra.mxu0 0.0
    %616 = vmatpush.msra.mxu0 0.0
    %617 = vmatpush.msra.mxu0 0.0
    %618 = vmatpush.msra.mxu0 0.0
    %619 = vmatpush.msra.mxu0 0.0
    %620 = vmatpush.msra.mxu0 0.0
    %621 = vmatpush.msra.mxu0 0.0
    %622 = vmatpush.msra.mxu0 %v599
    %623 = vmatpush.msra.mxu0 %v597
    %624 = vmatmul.f32.gmra.mxu0 %v603
    %v625 = vpop.f32.mrf.mxu0
    %v626 = vadd.f32 0.0, %v625
    %627 = vmatmul.f32.gmra.mxu0 %v606
    %v628 = vpop.f32.mrf.mxu0
    %v629 = vadd.f32 0.0, %v628
    %630 = vdwg.mxu0
    %v632 = vsel %vm148, %v626, 0
    %v635 = vsel %vm148, %v629, 0
    %637 = vmatpush.msra.mxu0 0.0
    %638 = vmatpush.msra.mxu0 0.0
    %639 = vmatpush.msra.mxu0 0.0
    %640 = vmatpush.msra.mxu0 0.0
    %641 = vmatpush.msra.mxu0 0.0
    %642 = vmatpush.msra.mxu0 0.0
    %643 = vmatpush.msra.mxu0 0.0
    %644 = vmatpush.msra.mxu0 0.0
    %645 = vmatpush.msra.mxu0 0.0
    %646 = vmatpush.msra.mxu0 0.0
    %647 = vmatpush.msra.mxu0 0.0
    %648 = vmatpush.msra.mxu0 0.0
    %649 = vmatpush.msra.mxu0 0.0
    %650 = vmatpush.msra.mxu0 0.0
    %651 = vmatpush.msra.mxu0 0.0
    %652 = vmatpush.msra.mxu0 %v89
    %653 = vmatmul.f32.gmra.mxu0 %v632
    %v654 = vpop.f32.mrf.mxu0
    %v655 = vadd.f32 0.0, %v654
    %656 = vmatmul.f32.gmra.mxu0 %v635
    %v657 = vpop.f32.mrf.mxu0
    %v658 = vadd.f32 0.0, %v657
    %659 = vdwg.mxu0
    %v660 = vadd.f32 %v529, %v655
    %v661 = vadd.f32 %v530, %v658
    %v663 = vperm.slane %v90, 0
    %v665 = vadd.f32 %v660, %v663
    %v666 = vadd.f32 %v661, %v663
    %v667 = vadd.f32 %v77, %v665
    %v668 = vadd.f32 %v78, %v666
    %v669 = vsel %vm112, %v667, 0.0
    %670 = vadd.xlane.f32.xlu0 %v669
    %v671 = vpop.xlane.xlu0 %670
    %v672 = vsel %vm112, %v668, 0.0
    %673 = vadd.xlane.f32.xlu0 %v672
    %v674 = vpop.xlane.xlu0 %673
    %v675 = vrcp.pop 32.0
    %v676 = vmul.f32 32.0, %v675
    %v677 = vsub.f32 1.0, %v676
    %v678 = vmul.f32 %v675, %v677
    %v679 = vadd.f32 %v675, %v678
    %vm680 = vweird.f32 %v675
    %v681 = vsel %vm680, %v675, %v679
    %v682 = vmul.f32 %v671, %v681
    %v683 = vmul.f32 %v674, %v681
    %v684 = vsub.f32 %v667, %v682
    %v685 = vsub.f32 %v668, %v683
    %v686 = vmul.f32 %v684, %v684
    %v687 = vmul.f32 %v685, %v685
    %v688 = vsel %vm112, %v686, 0.0
    %689 = vadd.xlane.f32.xlu0 %v688
    %v690 = vpop.xlane.xlu0 %689
    %v691 = vsel %vm112, %v687, 0.0
    %692 = vadd.xlane.f32.xlu0 %v691
    %v693 = vpop.xlane.xlu0 %692
    %v694 = vmul.f32 %v690, %v681
    %v695 = vmul.f32 %v693, %v681
    %v696 = vadd.f32 %v694, 1e-05
    %v697 = vadd.f32 %v695, 1e-05
    %v698 = vrsqrt.pop %v696
    %v699 = vmul.f32 %v698, %v696
    %v700 = vmul.f32 %v699, %v698
    %v701 = vmul.f32 0.5, %v700
    %v702 = vsub.f32 1.5, %v701
    %v703 = vmul.f32 %v698, %v702
    %vm704 = vweird.f32 %v696
    %vm705 = vweird.f32 %v698
    %vm706 = vmor %vm704, %vm705
    %v707 = vsel %vm706, %v698, %v703
    %v708 = vrsqrt.pop %v697
    %v709 = vmul.f32 %v708, %v697
    %v710 = vmul.f32 %v709, %v708
    %v711 = vmul.f32 0.5, %v710
    %v712 = vsub.f32 1.5, %v711
    %v713 = vmul.f32 %v708, %v712
    %vm714 = vweird.f32 %v697
    %vm715 = vweird.f32 %v708
    %vm716 = vmor %vm714, %vm715
    %v717 = vsel %vm716, %v708, %v713
    %v718 = vmul.f32 %v684, %v707
    %v719 = vmul.f32 %v685, %v717
    %v721 = vperm.slane %v105, 0
    %v723 = vmul.f32 %v718, %v721
    %v724 = vmul.f32 %v719, %v721
    %v726 = vperm.slane %v106, 0
    %v728 = vadd.f32 %v723, %v726
    %v729 = vadd.f32 %v724, %v726
    %v731 = vperm.slane %v95, 0
    %v734 = vsel %vm112, %v728, 0
    %v737 = vsel %vm112, %v729, 0
    %739 = vmatpush.msra.mxu0 0.0
    %740 = vmatpush.msra.mxu0 0.0
    %741 = vmatpush.msra.mxu0 0.0
    %742 = vmatpush.msra.mxu0 0.0
    %743 = vmatpush.msra.mxu0 0.0
    %744 = vmatpush.msra.mxu0 0.0
    %745 = vmatpush.msra.mxu0 0.0
    %746 = vmatpush.msra.mxu0 0.0
    %747 = vmatpush.msra.mxu0 0.0
    %748 = vmatpush.msra.mxu0 0.0
    %749 = vmatpush.msra.mxu0 0.0
    %750 = vmatpush.msra.mxu0 0.0
    %751 = vmatpush.msra.mxu0 %v94
    %752 = vmatpush.msra.mxu0 %v93
    %753 = vmatpush.msra.mxu0 %v92
    %754 = vmatpush.msra.mxu0 %v91
    %755 = vmatmul.f32.gmra.mxu0 %v734
    %v756 = vpop.f32.mrf.mxu0
    %v757 = vadd.f32 %v731, %v756
    %758 = vmatmul.f32.gmra.mxu0 %v737
    %v759 = vpop.f32.mrf.mxu0
    %v760 = vadd.f32 %v731, %v759
    %761 = vdwg.mxu0
    %v762 = vmax.f32 %v757, 0.0
    %v763 = vmax.f32 %v760, 0.0
    %v765 = vperm.slane %v104, 0
    %vm767 = vcmask 523264
    %v769 = vsel %vm767, %v762, 0
    %v772 = vsel %vm767, %v763, 0
    %774 = vmatpush.msra.mxu0 0.0
    %775 = vmatpush.msra.mxu0 0.0
    %776 = vmatpush.msra.mxu0 0.0
    %777 = vmatpush.msra.mxu0 0.0
    %778 = vmatpush.msra.mxu0 0.0
    %779 = vmatpush.msra.mxu0 0.0
    %780 = vmatpush.msra.mxu0 0.0
    %781 = vmatpush.msra.mxu0 0.0
    %782 = vmatpush.msra.mxu0 %v103
    %783 = vmatpush.msra.mxu0 %v102
    %784 = vmatpush.msra.mxu0 %v101
    %785 = vmatpush.msra.mxu0 %v100
    %786 = vmatpush.msra.mxu0 %v99
    %787 = vmatpush.msra.mxu0 %v98
    %788 = vmatpush.msra.mxu0 %v97
    %789 = vmatpush.msra.mxu0 %v96
    %790 = vmatmul.f32.gmra.mxu0 %v769
    %v791 = vpop.f32.mrf.mxu0
    %v792 = vadd.f32 %v765, %v791
    %793 = vmatmul.f32.gmra.mxu0 %v772
    %v794 = vpop.f32.mrf.mxu0
    %v795 = vadd.f32 %v765, %v794
    %796 = vdwg.mxu0
    %v797 = vadd.f32 %v728, %v792
    %v798 = vadd.f32 %v729, %v795
    %v799 = vsel %vm112, %v797, 0.0
    %800 = vadd.xlane.f32.xlu0 %v799
    %v801 = vpop.xlane.xlu0 %800
    %v802 = vsel %vm112, %v798, 0.0
    %803 = vadd.xlane.f32.xlu0 %v802
    %v804 = vpop.xlane.xlu0 %803
    %v805 = vmul.f32 %v801, %v681
    %v806 = vmul.f32 %v804, %v681
    %v807 = vsub.f32 %v797, %v805
    %v808 = vsub.f32 %v798, %v806
    %v809 = vmul.f32 %v807, %v807
    %v810 = vmul.f32 %v808, %v808
    %v811 = vsel %vm112, %v809, 0.0
    %812 = vadd.xlane.f32.xlu0 %v811
    %v813 = vpop.xlane.xlu0 %812
    %v814 = vsel %vm112, %v810, 0.0
    %815 = vadd.xlane.f32.xlu0 %v814
    %v816 = vpop.xlane.xlu0 %815
    %v817 = vmul.f32 %v813, %v681
    %v818 = vmul.f32 %v816, %v681
    %v819 = vadd.f32 %v817, 1e-05
    %v820 = vadd.f32 %v818, 1e-05
    %v821 = vrsqrt.pop %v819
    %v822 = vmul.f32 %v821, %v819
    %v823 = vmul.f32 %v822, %v821
    %v824 = vmul.f32 0.5, %v823
    %v825 = vsub.f32 1.5, %v824
    %v826 = vmul.f32 %v821, %v825
    %vm827 = vweird.f32 %v819
    %vm828 = vweird.f32 %v821
    %vm829 = vmor %vm827, %vm828
    %v830 = vsel %vm829, %v821, %v826
    %v831 = vrsqrt.pop %v820
    %v832 = vmul.f32 %v831, %v820
    %v833 = vmul.f32 %v832, %v831
    %v834 = vmul.f32 0.5, %v833
    %v835 = vsub.f32 1.5, %v834
    %v836 = vmul.f32 %v831, %v835
    %vm837 = vweird.f32 %v820
    %vm838 = vweird.f32 %v831
    %vm839 = vmor %vm837, %vm838
    %v840 = vsel %vm839, %v831, %v836
    %v841 = vmul.f32 %v807, %v830
    %v842 = vmul.f32 %v808, %v840
    %v844 = vperm.slane %v107, 0
    %v846 = vmul.f32 %v841, %v844
    %v847 = vmul.f32 %v842, %v844
    %v849 = vperm.slane %v108, 0
    %v851 = vadd.f32 %v846, %v849
    %v852 = vadd.f32 %v847, %v849
    %s853 = scalar_lea.vmem %s3, 32
    %v854 = vld [vmem:[%s853] sm:$0xff]
    %v855 = vld [vmem:[%s853 + $0x8] sm:$0xff]
    %v856 = vld [vmem:[%s853 + $0x10] sm:$0xff]
    %v857 = vld [vmem:[%s853 + $0x18] sm:$0xff]
    %s858 = scalar_lea.vmem %s4, 1
    %v859 = vld [vmem:[%s858] sm:$0x1]
    %s860 = scalar_lea.vmem %s5, 32
    %v861 = vld [vmem:[%s860] sm:$0xff]
    %v862 = vld [vmem:[%s860 + $0x8] sm:$0xff]
    %v863 = vld [vmem:[%s860 + $0x10] sm:$0xff]
    %v864 = vld [vmem:[%s860 + $0x18] sm:$0xff]
    %s865 = scalar_lea.vmem %s6, 1
    %v866 = vld [vmem:[%s865] sm:$0x1]
    %s867 = scalar_lea.vmem [#allocation2], 32
    %v868 = vld [vmem:[%s867] sm:$0xff]
    %v869 = vld [vmem:[%s867 + $0x8] sm:$0xff]
    %v870 = vld [vmem:[%s867 + $0x10] sm:$0xff]
    %v871 = vld [vmem:[%s867 + $0x18] sm:$0xff]
    %s872 = scalar_lea.vmem %s8, 1
    %v873 = vld [vmem:[%s872] sm:$0x1]
    %s874 = scalar_lea.vmem %s9, 64
    %v875 = vld [vmem:[%s874] sm:$0xff]
    %v876 = vld [vmem:[%s874 + $0x8] sm:$0xff]
    %v877 = vld [vmem:[%s874 + $0x10] sm:$0xff]
    %v878 = vld [vmem:[%s874 + $0x18] sm:$0xff]
    %v879 = vld [vmem:[%s874 + $0x20] sm:$0xff]
    %v880 = vld [vmem:[%s874 + $0x28] sm:$0xff]
    %v881 = vld [vmem:[%s874 + $0x30] sm:$0xff]
    %v882 = vld [vmem:[%s874 + $0x38] sm:$0xff]
    %s883 = scalar_lea.vmem %s10, 1
    %v884 = vld [vmem:[%s883] sm:$0x1]
    %s885 = scalar_lea.vmem %s11, 1
    %v886 = vld [vmem:[%s885] sm:$0x1]
    %s887 = scalar_lea.vmem %s12, 1
    %v888 = vld [vmem:[%s887] sm:$0x1]
    %s889 = scalar_lea.vmem %s13, 1
    %v890 = vld [vmem:[%s889] sm:$0x1]
    %s891 = scalar_lea.vmem %s14, 1
    %v892 = vld [vmem:[%s891] sm:$0x1]
    %v894 = vperm.slane %v859, 0
    %v897 = vsel %vm112, %v851, 0
    %v900 = vsel %vm112, %v852, 0
    %902 = vmatpush.msra.mxu0 0.0
    %903 = vmatpush.msra.mxu0 0.0
    %904 = vmatpush.msra.mxu0 0.0
    %905 = vmatpush.msra.mxu0 0.0
    %906 = vmatpush.msra.mxu0 0.0
    %907 = vmatpush.msra.mxu0 0.0
    %908 = vmatpush.msra.mxu0 0.0
    %909 = vmatpush.msra.mxu0 0.0
    %910 = vmatpush.msra.mxu0 0.0
    %911 = vmatpush.msra.mxu0 0.0
    %912 = vmatpush.msra.mxu0 0.0
    %913 = vmatpush.msra.mxu0 0.0
    %914 = vmatpush.msra.mxu0 %v857
    %915 = vmatpush.msra.mxu0 %v856
    %916 = vmatpush.msra.mxu0 %v855
    %917 = vmatpush.msra.mxu0 %v854
    %918 = vmatmul.f32.gmra.mxu0 %v897
    %v919 = vpop.f32.mrf.mxu0
    %v920 = vadd.f32 %v894, %v919
    %921 = vmatmul.f32.gmra.mxu0 %v900
    %v922 = vpop.f32.mrf.mxu0
    %v923 = vadd.f32 %v894, %v922
    %924 = vdwg.mxu0
    %927 = vrot.lane.b32.xlu0 %v920, 96
    %v928 = vpop.permute.xlu0 %927
    %929 = vrot.lane.b32.xlu0 %v923, 96
    %v930 = vpop.permute.xlu0 %929
    %v931 = vsel %vm148, %v920, 0
    %v933 = vsel %vm148, %v923, 0
    %v935 = vsel %vm148, %v928, 0
    %v937 = vsel %vm148, %v930, 0
    %939 = vmatpush.xpose.msra.mxu0 0.0
    %940 = vmatpush.xpose.msra.mxu0 0.0
    %941 = vmatpush.xpose.msra.mxu0 0.0
    %942 = vmatpush.xpose.msra.mxu0 0.0
    %943 = vmatpush.xpose.msra.mxu0 0.0
    %944 = vmatpush.xpose.msra.mxu0 0.0
    %945 = vmatpush.xpose.msra.mxu0 0.0
    %946 = vmatpush.xpose.msra.mxu0 0.0
    %947 = vmatpush.xpose.msra.mxu0 0.0
    %948 = vmatpush.xpose.msra.mxu0 0.0
    %949 = vmatpush.xpose.msra.mxu0 0.0
    %950 = vmatpush.xpose.msra.mxu0 0.0
    %951 = vmatpush.xpose.msra.mxu0 0.0
    %952 = vmatpush.xpose.msra.mxu0 0.0
    %953 = vmatpush.xpose.msra.mxu0 %v937
    %954 = vmatpush.xpose.msra.mxu0 %v935
    %955 = vmatmul.f32.gmra.mxu0 %v931
    %v956 = vpop.f32.mrf.mxu0
    %v957 = vadd.f32 0.0, %v956
    %958 = vmatmul.f32.gmra.mxu0 %v933
    %v959 = vpop.f32.mrf.mxu0
    %v960 = vadd.f32 0.0, %v959
    %961 = vdwg.mxu0
    %v962 = vmul.f32 %v957, 0.35355338
    %v963 = vmul.f32 %v960, 0.35355338
    %v964 = vadd.f32 %v962, %v79
    %v965 = vadd.f32 %v963, %v80
    %v966 = vsel %vm184, %v964, -inf
    %967 = vmax.xlane.f32.xlu0 %v966
    %v968 = vpop.xlane.xlu0 %967
    %v969 = vsel %vm184, %v965, -inf
    %970 = vmax.xlane.f32.xlu0 %v969
    %v971 = vpop.xlane.xlu0 %970
    %v972 = vsub.f32 %v964, %v968
    %v973 = vsub.f32 %v965, %v971
    %v974 = vmul.f32 %v972, 1.442695
    %v975 = vpow.pop %v974
    %v976 = vmul.f32 %v973, 1.442695
    %v977 = vpow.pop %v976
    %v978 = vsel %vm184, %v975, 0.0
    %979 = vadd.xlane.f32.xlu0 %v978
    %v980 = vpop.xlane.xlu0 %979
    %v981 = vsel %vm184, %v977, 0.0
    %982 = vadd.xlane.f32.xlu0 %v981
    %v983 = vpop.xlane.xlu0 %982
    %v984 = vrcp.pop %v980
    %v985 = vrcp.pop %v983
    %v986 = vmul.f32 %v975, %v984
    %v987 = vmul.f32 %v977, %v985
    %988 = vrot.lane.b32.xlu0 %v920, 64
    %v989 = vpop.permute.xlu0 %988
    %990 = vrot.lane.b32.xlu0 %v923, 64
    %v991 = vpop.permute.xlu0 %990
    %v995 = vsel %vm184, %v986, 0
    %v998 = vsel %vm184, %v987, 0
    %1000 = vmatpush.msra.mxu0 0.0
    %1001 = vmatpush.msra.mxu0 0.0
    %1002 = vmatpush.msra.mxu0 0.0
    %1003 = vmatpush.msra.mxu0 0.0
    %1004 = vmatpush.msra.mxu0 0.0
    %1005 = vmatpush.msra.mxu0 0.0
    %1006 = vmatpush.msra.mxu0 0.0
    %1007 = vmatpush.msra.mxu0 0.0
    %1008 = vmatpush.msra.mxu0 0.0
    %1009 = vmatpush.msra.mxu0 0.0
    %1010 = vmatpush.msra.mxu0 0.0
    %1011 = vmatpush.msra.mxu0 0.0
    %1012 = vmatpush.msra.mxu0 0.0
    %1013 = vmatpush.msra.mxu0 0.0
    %1014 = vmatpush.msra.mxu0 %v991
    %1015 = vmatpush.msra.mxu0 %v989
    %1016 = vmatmul.f32.gmra.mxu0 %v995
    %v1017 = vpop.f32.mrf.mxu0
    %v1018 = vadd.f32 0.0, %v1017
    %1019 = vmatmul.f32.gmra.mxu0 %v998
    %v1020 = vpop.f32.mrf.mxu0
    %v1021 = vadd.f32 0.0, %v1020
    %1022 = vdwg.mxu0
    %1023 = vrot.lane.b32.xlu0 %v920, 120
    %v1024 = vpop.permute.xlu0 %1023
    %1025 = vrot.lane.b32.xlu0 %v923, 120
    %v1026 = vpop.permute.xlu0 %1025
    %1027 = vrot.lane.b32.xlu0 %v920, 88
    %v1028 = vpop.permute.xlu0 %1027
    %1029 = vrot.lane.b32.xlu0 %v923, 88
    %v1030 = vpop.permute.xlu0 %1029
    %v1031 = vsel %vm148, %v1024, 0
    %v1033 = vsel %vm148, %v1026, 0
    %v1035 = vsel %vm148, %v1028, 0
    %v1037 = vsel %vm148, %v1030, 0
    %1039 = vmatpush.xpose.msra.mxu0 0.0
    %1040 = vmatpush.xpose.msra.mxu0 0.0
    %1041 = vmatpush.xpose.msra.mxu0 0.0
    %1042 = vmatpush.xpose.msra.mxu0 0.0
    %1043 = vmatpush.xpose.msra.mxu0 0.0
    %1044 = vmatpush.xpose.msra.mxu0 0.0
    %1045 = vmatpush.xpose.msra.mxu0 0.0
    %1046 = vmatpush.xpose.msra.mxu0 0.0
    %1047 = vmatpush.xpose.msra.mxu0 0.0
    %1048 = vmatpush.xpose.msra.mxu0 0.0
    %1049 = vmatpush.xpose.msra.mxu0 0.0
    %1050 = vmatpush.xpose.msra.mxu0 0.0
    %1051 = vmatpush.xpose.msra.mxu0 0.0
    %1052 = vmatpush.xpose.msra.mxu0 0.0
    %1053 = vmatpush.xpose.msra.mxu0 %v1037
    %1054 = vmatpush.xpose.msra.mxu0 %v1035
    %1055 = vmatmul.f32.gmra.mxu0 %v1031
    %v1056 = vpop.f32.mrf.mxu0
    %v1057 = vadd.f32 0.0, %v1056
    %1058 = vmatmul.f32.gmra.mxu0 %v1033
    %v1059 = vpop.f32.mrf.mxu0
    %v1060 = vadd.f32 0.0, %v1059
    %1061 = vdwg.mxu0
    %v1062 = vmul.f32 %v1057, 0.35355338
    %v1063 = vmul.f32 %v1060, 0.35355338
    %v1064 = vadd.f32 %v1062, %v79
    %v1065 = vadd.f32 %v1063, %v80
    %v1066 = vsel %vm184, %v1064, -inf
    %1067 = vmax.xlane.f32.xlu0 %v1066
    %v1068 = vpop.xlane.xlu0 %1067
    %v1069 = vsel %vm184, %v1065, -inf
    %1070 = vmax.xlane.f32.xlu0 %v1069
    %v1071 = vpop.xlane.xlu0 %1070
    %v1072 = vsub.f32 %v1064, %v1068
    %v1073 = vsub.f32 %v1065, %v1071
    %v1074 = vmul.f32 %v1072, 1.442695
    %v1075 = vpow.pop %v1074
    %v1076 = vmul.f32 %v1073, 1.442695
    %v1077 = vpow.pop %v1076
    %v1078 = vsel %vm184, %v1075, 0.0
    %1079 = vadd.xlane.f32.xlu0 %v1078
    %v1080 = vpop.xlane.xlu0 %1079
    %v1081 = vsel %vm184, %v1077, 0.0
    %1082 = vadd.xlane.f32.xlu0 %v1081
    %v1083 = vpop.xlane.xlu0 %1082
    %v1084 = vrcp.pop %v1080
    %v1085 = vrcp.pop %v1083
    %v1086 = vmul.f32 %v1075, %v1084
    %v1087 = vmul.f32 %v1077, %v1085
    %1088 = vrot.lane.b32.xlu0 %v920, 56
    %v1089 = vpop.permute.xlu0 %1088
    %1090 = vrot.lane.b32.xlu0 %v923, 56
    %v1091 = vpop.permute.xlu0 %1090
    %v1095 = vsel %vm184, %v1086, 0
    %v1098 = vsel %vm184, %v1087, 0
    %1100 = vmatpush.msra.mxu0 0.0
    %1101 = vmatpush.msra.mxu0 0.0
    %1102 = vmatpush.msra.mxu0 0.0
    %1103 = vmatpush.msra.mxu0 0.0
    %1104 = vmatpush.msra.mxu0 0.0
    %1105 = vmatpush.msra.mxu0 0.0
    %1106 = vmatpush.msra.mxu0 0.0
    %1107 = vmatpush.msra.mxu0 0.0
    %1108 = vmatpush.msra.mxu0 0.0
    %1109 = vmatpush.msra.mxu0 0.0
    %1110 = vmatpush.msra.mxu0 0.0
    %1111 = vmatpush.msra.mxu0 0.0
    %1112 = vmatpush.msra.mxu0 0.0
    %1113 = vmatpush.msra.mxu0 0.0
    %1114 = vmatpush.msra.mxu0 %v1091
    %1115 = vmatpush.msra.mxu0 %v1089
    %1116 = vmatmul.f32.gmra.mxu0 %v1095
    %v1117 = vpop.f32.mrf.mxu0
    %v1118 = vadd.f32 0.0, %v1117
    %1119 = vmatmul.f32.gmra.mxu0 %v1098
    %v1120 = vpop.f32.mrf.mxu0
    %v1121 = vadd.f32 0.0, %v1120
    %1122 = vdwg.mxu0
    %v1124 = vsel %vm148, %v1118, 0
    %v1127 = vsel %vm148, %v1121, 0
    %1129 = vmatpush.msra.mxu0 0.0
    %1130 = vmatpush.msra.mxu0 0.0
    %1131 = vmatpush.msra.mxu0 0.0
    %1132 = vmatpush.msra.mxu0 0.0
    %1133 = vmatpush.msra.mxu0 0.0
    %1134 = vmatpush.msra.mxu0 0.0
    %1135 = vmatpush.msra.mxu0 0.0
    %1136 = vmatpush.msra.mxu0 0.0
    %1137 = vmatpush.msra.mxu0 0.0
    %1138 = vmatpush.msra.mxu0 0.0
    %1139 = vmatpush.msra.mxu0 0.0
    %1140 = vmatpush.msra.mxu0 0.0
    %1141 = vmatpush.msra.mxu0 0.0
    %1142 = vmatpush.msra.mxu0 0.0
    %1143 = vmatpush.msra.mxu0 0.0
    %1144 = vmatpush.msra.mxu0 %v862
    %1145 = vmatmul.f32.gmra.mxu0 %v1124
    %v1146 = vpop.f32.mrf.mxu0
    %v1147 = vadd.f32 0.0, %v1146
    %1148 = vmatmul.f32.gmra.mxu0 %v1127
    %v1149 = vpop.f32.mrf.mxu0
    %v1150 = vadd.f32 0.0, %v1149
    %1151 = vdwg.mxu0
    %v1153 = vsel %vm148, %v1018, 0
    %v1156 = vsel %vm148, %v1021, 0
    %1158 = vmatpush.msra.mxu0 0.0
    %1159 = vmatpush.msra.mxu0 0.0
    %1160 = vmatpush.msra.mxu0 0.0
    %1161 = vmatpush.msra.mxu0 0.0
    %1162 = vmatpush.msra.mxu0 0.0
    %1163 = vmatpush.msra.mxu0 0.0
    %1164 = vmatpush.msra.mxu0 0.0
    %1165 = vmatpush.msra.mxu0 0.0
    %1166 = vmatpush.msra.mxu0 0.0
    %1167 = vmatpush.msra.mxu0 0.0
    %1168 = vmatpush.msra.mxu0 0.0
    %1169 = vmatpush.msra.mxu0 0.0
    %1170 = vmatpush.msra.mxu0 0.0
    %1171 = vmatpush.msra.mxu0 0.0
    %1172 = vmatpush.msra.mxu0 0.0
    %1173 = vmatpush.msra.mxu0 %v861
    %1174 = vmatmul.f32.gmra.mxu0 %v1153
    %v1175 = vpop.f32.mrf.mxu0
    %v1176 = vadd.f32 %v1147, %v1175
    %1177 = vmatmul.f32.gmra.mxu0 %v1156
    %v1178 = vpop.f32.mrf.mxu0
    %v1179 = vadd.f32 %v1150, %v1178
    %1180 = vdwg.mxu0
    %1181 = vrot.lane.b32.xlu0 %v920, 112
    %v1182 = vpop.permute.xlu0 %1181
    %1183 = vrot.lane.b32.xlu0 %v923, 112
    %v1184 = vpop.permute.xlu0 %1183
    %1185 = vrot.lane.b32.xlu0 %v920, 80
    %v1186 = vpop.permute.xlu0 %1185
    %1187 = vrot.lane.b32.xlu0 %v923, 80
    %v1188 = vpop.permute.xlu0 %1187
    %v1189 = vsel %vm148, %v1182, 0
    %v1191 = vsel %vm148, %v1184, 0
    %v1193 = vsel %vm148, %v1186, 0
    %v1195 = vsel %vm148, %v1188, 0
    %1197 = vmatpush.xpose.msra.mxu0 0.0
    %1198 = vmatpush.xpose.msra.mxu0 0.0
    %1199 = vmatpush.xpose.msra.mxu0 0.0
    %1200 = vmatpush.xpose.msra.mxu0 0.0
    %1201 = vmatpush.xpose.msra.mxu0 0.0
    %1202 = vmatpush.xpose.msra.mxu0 0.0
    %1203 = vmatpush.xpose.msra.mxu0 0.0
    %1204 = vmatpush.xpose.msra.mxu0 0.0
    %1205 = vmatpush.xpose.msra.mxu0 0.0
    %1206 = vmatpush.xpose.msra.mxu0 0.0
    %1207 = vmatpush.xpose.msra.mxu0 0.0
    %1208 = vmatpush.xpose.msra.mxu0 0.0
    %1209 = vmatpush.xpose.msra.mxu0 0.0
    %1210 = vmatpush.xpose.msra.mxu0 0.0
    %1211 = vmatpush.xpose.msra.mxu0 %v1195
    %1212 = vmatpush.xpose.msra.mxu0 %v1193
    %1213 = vmatmul.f32.gmra.mxu0 %v1189
    %v1214 = vpop.f32.mrf.mxu0
    %v1215 = vadd.f32 0.0, %v1214
    %1216 = vmatmul.f32.gmra.mxu0 %v1191
    %v1217 = vpop.f32.mrf.mxu0
    %v1218 = vadd.f32 0.0, %v1217
    %1219 = vdwg.mxu0
    %v1220 = vmul.f32 %v1215, 0.35355338
    %v1221 = vmul.f32 %v1218, 0.35355338
    %v1222 = vadd.f32 %v1220, %v79
    %v1223 = vadd.f32 %v1221, %v80
    %v1224 = vsel %vm184, %v1222, -inf
    %1225 = vmax.xlane.f32.xlu0 %v1224
    %v1226 = vpop.xlane.xlu0 %1225
    %v1227 = vsel %vm184, %v1223, -inf
    %1228 = vmax.xlane.f32.xlu0 %v1227
    %v1229 = vpop.xlane.xlu0 %1228
    %v1230 = vsub.f32 %v1222, %v1226
    %v1231 = vsub.f32 %v1223, %v1229
    %v1232 = vmul.f32 %v1230, 1.442695
    %v1233 = vpow.pop %v1232
    %v1234 = vmul.f32 %v1231, 1.442695
    %v1235 = vpow.pop %v1234
    %v1236 = vsel %vm184, %v1233, 0.0
    %1237 = vadd.xlane.f32.xlu0 %v1236
    %v1238 = vpop.xlane.xlu0 %1237
    %v1239 = vsel %vm184, %v1235, 0.0
    %1240 = vadd.xlane.f32.xlu0 %v1239
    %v1241 = vpop.xlane.xlu0 %1240
    %v1242 = vrcp.pop %v1238
    %v1243 = vrcp.pop %v1241
    %v1244 = vmul.f32 %v1233, %v1242
    %v1245 = vmul.f32 %v1235, %v1243
    %1246 = vrot.lane.b32.xlu0 %v920, 48
    %v1247 = vpop.permute.xlu0 %1246
    %1248 = vrot.lane.b32.xlu0 %v923, 48
    %v1249 = vpop.permute.xlu0 %1248
    %v1253 = vsel %vm184, %v1244, 0
    %v1256 = vsel %vm184, %v1245, 0
    %1258 = vmatpush.msra.mxu0 0.0
    %1259 = vmatpush.msra.mxu0 0.0
    %1260 = vmatpush.msra.mxu0 0.0
    %1261 = vmatpush.msra.mxu0 0.0
    %1262 = vmatpush.msra.mxu0 0.0
    %1263 = vmatpush.msra.mxu0 0.0
    %1264 = vmatpush.msra.mxu0 0.0
    %1265 = vmatpush.msra.mxu0 0.0
    %1266 = vmatpush.msra.mxu0 0.0
    %1267 = vmatpush.msra.mxu0 0.0
    %1268 = vmatpush.msra.mxu0 0.0
    %1269 = vmatpush.msra.mxu0 0.0
    %1270 = vmatpush.msra.mxu0 0.0
    %1271 = vmatpush.msra.mxu0 0.0
    %1272 = vmatpush.msra.mxu0 %v1249
    %1273 = vmatpush.msra.mxu0 %v1247
    %1274 = vmatmul.f32.gmra.mxu0 %v1253
    %v1275 = vpop.f32.mrf.mxu0
    %v1276 = vadd.f32 0.0, %v1275
    %1277 = vmatmul.f32.gmra.mxu0 %v1256
    %v1278 = vpop.f32.mrf.mxu0
    %v1279 = vadd.f32 0.0, %v1278
    %1280 = vdwg.mxu0
    %v1282 = vsel %vm148, %v1276, 0
    %v1285 = vsel %vm148, %v1279, 0
    %1287 = vmatpush.msra.mxu0 0.0
    %1288 = vmatpush.msra.mxu0 0.0
    %1289 = vmatpush.msra.mxu0 0.0
    %1290 = vmatpush.msra.mxu0 0.0
    %1291 = vmatpush.msra.mxu0 0.0
    %1292 = vmatpush.msra.mxu0 0.0
    %1293 = vmatpush.msra.mxu0 0.0
    %1294 = vmatpush.msra.mxu0 0.0
    %1295 = vmatpush.msra.mxu0 0.0
    %1296 = vmatpush.msra.mxu0 0.0
    %1297 = vmatpush.msra.mxu0 0.0
    %1298 = vmatpush.msra.mxu0 0.0
    %1299 = vmatpush.msra.mxu0 0.0
    %1300 = vmatpush.msra.mxu0 0.0
    %1301 = vmatpush.msra.mxu0 0.0
    %1302 = vmatpush.msra.mxu0 %v863
    %1303 = vmatmul.f32.gmra.mxu0 %v1282
    %v1304 = vpop.f32.mrf.mxu0
    %v1305 = vadd.f32 0.0, %v1304
    %1306 = vmatmul.f32.gmra.mxu0 %v1285
    %v1307 = vpop.f32.mrf.mxu0
    %v1308 = vadd.f32 0.0, %v1307
    %1309 = vdwg.mxu0
    %v1310 = vadd.f32 %v1176, %v1305
    %v1311 = vadd.f32 %v1179, %v1308
    %1312 = vrot.lane.b32.xlu0 %v920, 104
    %v1313 = vpop.permute.xlu0 %1312
    %1314 = vrot.lane.b32.xlu0 %v923, 104
    %v1315 = vpop.permute.xlu0 %1314
    %1316 = vrot.lane.b32.xlu0 %v920, 72
    %v1317 = vpop.permute.xlu0 %1316
    %1318 = vrot.lane.b32.xlu0 %v923, 72
    %v1319 = vpop.permute.xlu0 %1318
    %v1320 = vsel %vm148, %v1313, 0
    %v1322 = vsel %vm148, %v1315, 0
    %v1324 = vsel %vm148, %v1317, 0
    %v1326 = vsel %vm148, %v1319, 0
    %1328 = vmatpush.xpose.msra.mxu0 0.0
    %1329 = vmatpush.xpose.msra.mxu0 0.0
    %1330 = vmatpush.xpose.msra.mxu0 0.0
    %1331 = vmatpush.xpose.msra.mxu0 0.0
    %1332 = vmatpush.xpose.msra.mxu0 0.0
    %1333 = vmatpush.xpose.msra.mxu0 0.0
    %1334 = vmatpush.xpose.msra.mxu0 0.0
    %1335 = vmatpush.xpose.msra.mxu0 0.0
    %1336 = vmatpush.xpose.msra.mxu0 0.0
    %1337 = vmatpush.xpose.msra.mxu0 0.0
    %1338 = vmatpush.xpose.msra.mxu0 0.0
    %1339 = vmatpush.xpose.msra.mxu0 0.0
    %1340 = vmatpush.xpose.msra.mxu0 0.0
    %1341 = vmatpush.xpose.msra.mxu0 0.0
    %1342 = vmatpush.xpose.msra.mxu0 %v1326
    %1343 = vmatpush.xpose.msra.mxu0 %v1324
    %1344 = vmatmul.f32.gmra.mxu0 %v1320
    %v1345 = vpop.f32.mrf.mxu0
    %v1346 = vadd.f32 0.0, %v1345
    %1347 = vmatmul.f32.gmra.mxu0 %v1322
    %v1348 = vpop.f32.mrf.mxu0
    %v1349 = vadd.f32 0.0, %v1348
    %1350 = vdwg.mxu0
    %v1351 = vmul.f32 %v1346, 0.35355338
    %v1352 = vmul.f32 %v1349, 0.35355338
    %v1353 = vadd.f32 %v1351, %v79
    %v1354 = vadd.f32 %v1352, %v80
    %v1355 = vsel %vm184, %v1353, -inf
    %1356 = vmax.xlane.f32.xlu0 %v1355
    %v1357 = vpop.xlane.xlu0 %1356
    %v1358 = vsel %vm184, %v1354, -inf
    %1359 = vmax.xlane.f32.xlu0 %v1358
    %v1360 = vpop.xlane.xlu0 %1359
    %v1361 = vsub.f32 %v1353, %v1357
    %v1362 = vsub.f32 %v1354, %v1360
    %v1363 = vmul.f32 %v1361, 1.442695
    %v1364 = vpow.pop %v1363
    %v1365 = vmul.f32 %v1362, 1.442695
    %v1366 = vpow.pop %v1365
    %v1367 = vsel %vm184, %v1364, 0.0
    %1368 = vadd.xlane.f32.xlu0 %v1367
    %v1369 = vpop.xlane.xlu0 %1368
    %v1370 = vsel %vm184, %v1366, 0.0
    %1371 = vadd.xlane.f32.xlu0 %v1370
    %v1372 = vpop.xlane.xlu0 %1371
    %v1373 = vrcp.pop %v1369
    %v1374 = vrcp.pop %v1372
    %v1375 = vmul.f32 %v1364, %v1373
    %v1376 = vmul.f32 %v1366, %v1374
    %1377 = vrot.lane.b32.xlu0 %v920, 40
    %v1378 = vpop.permute.xlu0 %1377
    %1379 = vrot.lane.b32.xlu0 %v923, 40
    %v1380 = vpop.permute.xlu0 %1379
    %v1384 = vsel %vm184, %v1375, 0
    %v1387 = vsel %vm184, %v1376, 0
    %1389 = vmatpush.msra.mxu0 0.0
    %1390 = vmatpush.msra.mxu0 0.0
    %1391 = vmatpush.msra.mxu0 0.0
    %1392 = vmatpush.msra.mxu0 0.0
    %1393 = vmatpush.msra.mxu0 0.0
    %1394 = vmatpush.msra.mxu0 0.0
    %1395 = vmatpush.msra.mxu0 0.0
    %1396 = vmatpush.msra.mxu0 0.0
    %1397 = vmatpush.msra.mxu0 0.0
    %1398 = vmatpush.msra.mxu0 0.0
    %1399 = vmatpush.msra.mxu0 0.0
    %1400 = vmatpush.msra.mxu0 0.0
    %1401 = vmatpush.msra.mxu0 0.0
    %1402 = vmatpush.msra.mxu0 0.0
    %1403 = vmatpush.msra.mxu0 %v1380
    %1404 = vmatpush.msra.mxu0 %v1378
    %1405 = vmatmul.f32.gmra.mxu0 %v1384
    %v1406 = vpop.f32.mrf.mxu0
    %v1407 = vadd.f32 0.0, %v1406
    %1408 = vmatmul.f32.gmra.mxu0 %v1387
    %v1409 = vpop.f32.mrf.mxu0
    %v1410 = vadd.f32 0.0, %v1409
    %1411 = vdwg.mxu0
    %v1413 = vsel %vm148, %v1407, 0
    %v1416 = vsel %vm148, %v1410, 0
    %1418 = vmatpush.msra.mxu0 0.0
    %1419 = vmatpush.msra.mxu0 0.0
    %1420 = vmatpush.msra.mxu0 0.0
    %1421 = vmatpush.msra.mxu0 0.0
    %1422 = vmatpush.msra.mxu0 0.0
    %1423 = vmatpush.msra.mxu0 0.0
    %1424 = vmatpush.msra.mxu0 0.0
    %1425 = vmatpush.msra.mxu0 0.0
    %1426 = vmatpush.msra.mxu0 0.0
    %1427 = vmatpush.msra.mxu0 0.0
    %1428 = vmatpush.msra.mxu0 0.0
    %1429 = vmatpush.msra.mxu0 0.0
    %1430 = vmatpush.msra.mxu0 0.0
    %1431 = vmatpush.msra.mxu0 0.0
    %1432 = vmatpush.msra.mxu0 0.0
    %1433 = vmatpush.msra.mxu0 %v864
    %1434 = vmatmul.f32.gmra.mxu0 %v1413
    %v1435 = vpop.f32.mrf.mxu0
    %v1436 = vadd.f32 0.0, %v1435
    %1437 = vmatmul.f32.gmra.mxu0 %v1416
    %v1438 = vpop.f32.mrf.mxu0
    %v1439 = vadd.f32 0.0, %v1438
    %1440 = vdwg.mxu0
    %v1441 = vadd.f32 %v1310, %v1436
    %v1442 = vadd.f32 %v1311, %v1439
    %v1444 = vperm.slane %v866, 0
    %v1446 = vadd.f32 %v1441, %v1444
    %v1447 = vadd.f32 %v1442, %v1444
    %v1448 = vadd.f32 %v851, %v1446
    %v1449 = vadd.f32 %v852, %v1447
    %v1450 = vsel %vm112, %v1448, 0.0
    %1451 = vadd.xlane.f32.xlu0 %v1450
    %v1452 = vpop.xlane.xlu0 %1451
    %v1453 = vsel %vm112, %v1449, 0.0
    %1454 = vadd.xlane.f32.xlu0 %v1453
    %v1455 = vpop.xlane.xlu0 %1454
    %v1456 = vmul.f32 %v1452, %v681
    %v1457 = vmul.f32 %v1455, %v681
    %v1458 = vsub.f32 %v1448, %v1456
    %v1459 = vsub.f32 %v1449, %v1457
    %v1460 = vmul.f32 %v1458, %v1458
    %v1461 = vmul.f32 %v1459, %v1459
    %v1462 = vsel %vm112, %v1460, 0.0
    %1463 = vadd.xlane.f32.xlu0 %v1462
    %v1464 = vpop.xlane.xlu0 %1463
    %v1465 = vsel %vm112, %v1461, 0.0
    %1466 = vadd.xlane.f32.xlu0 %v1465
    %v1467 = vpop.xlane.xlu0 %1466
    %v1468 = vmul.f32 %v1464, %v681
    %v1469 = vmul.f32 %v1467, %v681
    %v1470 = vadd.f32 %v1468, 1e-05
    %v1471 = vadd.f32 %v1469, 1e-05
    %v1472 = vrsqrt.pop %v1470
    %v1473 = vmul.f32 %v1472, %v1470
    %v1474 = vmul.f32 %v1473, %v1472
    %v1475 = vmul.f32 0.5, %v1474
    %v1476 = vsub.f32 1.5, %v1475
    %v1477 = vmul.f32 %v1472, %v1476
    %vm1478 = vweird.f32 %v1470
    %vm1479 = vweird.f32 %v1472
    %vm1480 = vmor %vm1478, %vm1479
    %v1481 = vsel %vm1480, %v1472, %v1477
    %v1482 = vrsqrt.pop %v1471
    %v1483 = vmul.f32 %v1482, %v1471
    %v1484 = vmul.f32 %v1483, %v1482
    %v1485 = vmul.f32 0.5, %v1484
    %v1486 = vsub.f32 1.5, %v1485
    %v1487 = vmul.f32 %v1482, %v1486
    %vm1488 = vweird.f32 %v1471
    %vm1489 = vweird.f32 %v1482
    %vm1490 = vmor %vm1488, %vm1489
    %v1491 = vsel %vm1490, %v1482, %v1487
    %v1492 = vmul.f32 %v1458, %v1481
    %v1493 = vmul.f32 %v1459, %v1491
    %v1495 = vperm.slane %v886, 0
    %v1497 = vmul.f32 %v1492, %v1495
    %v1498 = vmul.f32 %v1493, %v1495
    %v1500 = vperm.slane %v888, 0
    %v1502 = vadd.f32 %v1497, %v1500
    %v1503 = vadd.f32 %v1498, %v1500
    %v1505 = vperm.slane %v873, 0
    %v1508 = vsel %vm112, %v1502, 0
    %v1511 = vsel %vm112, %v1503, 0
    %1513 = vmatpush.msra.mxu0 0.0
    %1514 = vmatpush.msra.mxu0 0.0
    %1515 = vmatpush.msra.mxu0 0.0
    %1516 = vmatpush.msra.mxu0 0.0
    %1517 = vmatpush.msra.mxu0 0.0
    %1518 = vmatpush.msra.mxu0 0.0
    %1519 = vmatpush.msra.mxu0 0.0
    %1520 = vmatpush.msra.mxu0 0.0
    %1521 = vmatpush.msra.mxu0 0.0
    %1522 = vmatpush.msra.mxu0 0.0
    %1523 = vmatpush.msra.mxu0 0.0
    %1524 = vmatpush.msra.mxu0 0.0
    %1525 = vmatpush.msra.mxu0 %v871
    %1526 = vmatpush.msra.mxu0 %v870
    %1527 = vmatpush.msra.mxu0 %v869
    %1528 = vmatpush.msra.mxu0 %v868
    %1529 = vmatmul.f32.gmra.mxu0 %v1508
    %v1530 = vpop.f32.mrf.mxu0
    %v1531 = vadd.f32 %v1505, %v1530
    %1532 = vmatmul.f32.gmra.mxu0 %v1511
    %v1533 = vpop.f32.mrf.mxu0
    %v1534 = vadd.f32 %v1505, %v1533
    %1535 = vdwg.mxu0
    %v1536 = vmax.f32 %v1531, 0.0
    %v1537 = vmax.f32 %v1534, 0.0
    %v1539 = vperm.slane %v884, 0
    %v1542 = vsel %vm767, %v1536, 0
    %v1545 = vsel %vm767, %v1537, 0
    %1547 = vmatpush.msra.mxu0 0.0
    %1548 = vmatpush.msra.mxu0 0.0
    %1549 = vmatpush.msra.mxu0 0.0
    %1550 = vmatpush.msra.mxu0 0.0
    %1551 = vmatpush.msra.mxu0 0.0
    %1552 = vmatpush.msra.mxu0 0.0
    %1553 = vmatpush.msra.mxu0 0.0
    %1554 = vmatpush.msra.mxu0 0.0
    %1555 = vmatpush.msra.mxu0 %v882
    %1556 = vmatpush.msra.mxu0 %v881
    %1557 = vmatpush.msra.mxu0 %v880
    %1558 = vmatpush.msra.mxu0 %v879
    %1559 = vmatpush.msra.mxu0 %v878
    %1560 = vmatpush.msra.mxu0 %v877
    %1561 = vmatpush.msra.mxu0 %v876
    %1562 = vmatpush.msra.mxu0 %v875
    %1563 = vmatmul.f32.gmra.mxu0 %v1542
    %v1564 = vpop.f32.mrf.mxu0
    %v1565 = vadd.f32 %v1539, %v1564
    %1566 = vmatmul.f32.gmra.mxu0 %v1545
    %v1567 = vpop.f32.mrf.mxu0
    %v1568 = vadd.f32 %v1539, %v1567
    %1569 = vdwg.mxu0
    %v1570 = vadd.f32 %v1502, %v1565
    %v1571 = vadd.f32 %v1503, %v1568
    %v1572 = vsel %vm112, %v1570, 0.0
    %1573 = vadd.xlane.f32.xlu0 %v1572
    %v1574 = vpop.xlane.xlu0 %1573
    %v1575 = vsel %vm112, %v1571, 0.0
    %1576 = vadd.xlane.f32.xlu0 %v1575
    %v1577 = vpop.xlane.xlu0 %1576
    %v1578 = vmul.f32 %v1574, %v681
    %v1579 = vmul.f32 %v1577, %v681
    %v1580 = vsub.f32 %v1570, %v1578
    %v1581 = vsub.f32 %v1571, %v1579
    %v1582 = vmul.f32 %v1580, %v1580
    %v1583 = vmul.f32 %v1581, %v1581
    %v1584 = vsel %vm112, %v1582, 0.0
    %1585 = vadd.xlane.f32.xlu0 %v1584
    %v1586 = vpop.xlane.xlu0 %1585
    %v1587 = vsel %vm112, %v1583, 0.0
    %1588 = vadd.xlane.f32.xlu0 %v1587
    %v1589 = vpop.xlane.xlu0 %1588
    %v1590 = vmul.f32 %v1586, %v681
    %v1591 = vmul.f32 %v1589, %v681
    %v1592 = vadd.f32 %v1590, 1e-05
    %v1593 = vadd.f32 %v1591, 1e-05
    %v1594 = vrsqrt.pop %v1592
    %v1595 = vmul.f32 %v1594, %v1592
    %v1596 = vmul.f32 %v1595, %v1594
    %v1597 = vmul.f32 0.5, %v1596
    %v1598 = vsub.f32 1.5, %v1597
    %v1599 = vmul.f32 %v1594, %v1598
    %vm1600 = vweird.f32 %v1592
    %vm1601 = vweird.f32 %v1594
    %vm1602 = vmor %vm1600, %vm1601
    %v1603 = vsel %vm1602, %v1594, %v1599
    %v1604 = vrsqrt.pop %v1593
    %v1605 = vmul.f32 %v1604, %v1593
    %v1606 = vmul.f32 %v1605, %v1604
    %v1607 = vmul.f32 0.5, %v1606
    %v1608 = vsub.f32 1.5, %v1607
    %v1609 = vmul.f32 %v1604, %v1608
    %vm1610 = vweird.f32 %v1593
    %vm1611 = vweird.f32 %v1604
    %vm1612 = vmor %vm1610, %vm1611
    %v1613 = vsel %vm1612, %v1604, %v1609
    %v1614 = vmul.f32 %v1580, %v1603
    %v1615 = vmul.f32 %v1581, %v1613
    %v1617 = vperm.slane %v890, 0
    %v1619 = vmul.f32 %v1614, %v1617
    %v1620 = vmul.f32 %v1615, %v1617
    %v1622 = vperm.slane %v892, 0
    %v1624 = vadd.f32 %v1619, %v1622
    %v1625 = vadd.f32 %v1620, %v1622
    %v1626 = vld [vmem:[%s15] sm:$0xff]
    %v1627 = vld [vmem:[%s15 + $0x8] sm:$0xff]
    %v1628 = vld [vmem:[%s15 + $0x10] sm:$0xff]
    %v1629 = vld [vmem:[%s15 + $0x18] sm:$0xff]
    %s1630 = scalar_lea.vmem %s15, 32
    %v1631 = vld [vmem:[%s1630] sm:$0xff]
    %v1632 = vld [vmem:[%s1630 + $0x8] sm:$0xff]
    %v1633 = vld [vmem:[%s1630 + $0x10] sm:$0xff]
    %v1634 = vld [vmem:[%s1630 + $0x18] sm:$0xff]
    %v1637 = vrot.slane %v1624, 1
    %vm1638 = vcmask 1041409
    %v1639 = vsel %vm1638, %v1625, %v1637
    %v1640 = vsel %vm112, %v1639, 0
    %1642 = vmatpush.msra.mxu0 0.0
    %1643 = vmatpush.msra.mxu0 0.0
    %1644 = vmatpush.msra.mxu0 0.0
    %1645 = vmatpush.msra.mxu0 0.0
    %1646 = vmatpush.msra.mxu0 0.0
    %1647 = vmatpush.msra.mxu0 0.0
    %1648 = vmatpush.msra.mxu0 0.0
    %1649 = vmatpush.msra.mxu0 0.0
    %1650 = vmatpush.msra.mxu0 0.0
    %1651 = vmatpush.msra.mxu0 0.0
    %1652 = vmatpush.msra.mxu0 0.0
    %1653 = vmatpush.msra.mxu0 0.0
    %1654 = vmatpush.msra.mxu0 %v1634
    %1655 = vmatpush.msra.mxu0 %v1633
    %1656 = vmatpush.msra.mxu0 %v1632
    %1657 = vmatpush.msra.mxu0 %v1631
    %1658 = vmatmul.f32.gmra.mxu0 %v1640
    %v1659 = vpop.f32.mrf.mxu0
    %v1660 = vadd.f32 0.0, %v1659
    %1661 = vdwg.mxu0
    %v1662 = vrot.slane %v1625, 7
    %v1663 = vsel %vm1638, %v1662, %v1624
    %v1664 = vsel %vm112, %v1663, 0
    %1666 = vmatpush.msra.mxu0 0.0
    %1667 = vmatpush.msra.mxu0 0.0
    %1668 = vmatpush.msra.mxu0 0.0
    %1669 = vmatpush.msra.mxu0 0.0
    %1670 = vmatpush.msra.mxu0 0.0
    %1671 = vmatpush.msra.mxu0 0.0
    %1672 = vmatpush.msra.mxu0 0.0
    %1673 = vmatpush.msra.mxu0 0.0
    %1674 = vmatpush.msra.mxu0 0.0
    %1675 = vmatpush.msra.mxu0 0.0
    %1676 = vmatpush.msra.mxu0 0.0
    %1677 = vmatpush.msra.mxu0 0.0
    %1678 = vmatpush.msra.mxu0 %v1629
    %1679 = vmatpush.msra.mxu0 %v1628
    %1680 = vmatpush.msra.mxu0 %v1627
    %1681 = vmatpush.msra.mxu0 %v1626
    %1682 = vmatmul.f32.gmra.mxu0 %v1664
    %v1683 = vpop.f32.mrf.mxu0
    %v1684 = vadd.f32 %v1660, %v1683
    %1685 = vdwg.mxu0
    %s1686 = scalar_lea.vmem %s15, 64
    %v1687 = vld [vmem:[%s1686] sm:$0xff]
    %v1688 = vld [vmem:[%s1686 + $0x8] sm:$0xff]
    %v1689 = vld [vmem:[%s1686 + $0x10] sm:$0xff]
    %v1690 = vld [vmem:[%s1686 + $0x18] sm:$0xff]
    %v1691 = vrot.slane %v1624, 2
    %v1692 = vrot.slane %v1625, 1
    %v1693 = vsel %vm1638, %v1692, %v1691
    %v1694 = vsel %vm112, %v1693, 0
    %1696 = vmatpush.msra.mxu0 0.0
    %1697 = vmatpush.msra.mxu0 0.0
    %1698 = vmatpush.msra.mxu0 0.0
    %1699 = vmatpush.msra.mxu0 0.0
    %1700 = vmatpush.msra.mxu0 0.0
    %1701 = vmatpush.msra.mxu0 0.0
    %1702 = vmatpush.msra.mxu0 0.0
    %1703 = vmatpush.msra.mxu0 0.0
    %1704 = vmatpush.msra.mxu0 0.0
    %1705 = vmatpush.msra.mxu0 0.0
    %1706 = vmatpush.msra.mxu0 0.0
    %1707 = vmatpush.msra.mxu0 0.0
    %1708 = vmatpush.msra.mxu0 %v1690
    %1709 = vmatpush.msra.mxu0 %v1689
    %1710 = vmatpush.msra.mxu0 %v1688
    %1711 = vmatpush.msra.mxu0 %v1687
    %1712 = vmatmul.f32.gmra.mxu0 %v1694
    %v1713 = vpop.f32.mrf.mxu0
    %v1714 = vadd.f32 0.0, %v1713
    %1715 = vdwg.mxu0
    %v1716 = vadd.f32 %v1684, %v1714
    %s1717 = scalar_lea.vmem %s15, 96
    %v1718 = vld [vmem:[%s1717] sm:$0xff]
    %v1719 = vld [vmem:[%s1717 + $0x8] sm:$0xff]
    %v1720 = vld [vmem:[%s1717 + $0x10] sm:$0xff]
    %v1721 = vld [vmem:[%s1717 + $0x18] sm:$0xff]
    %v1722 = vrot.slane %v1624, 3
    %v1723 = vrot.slane %v1625, 2
    %v1724 = vsel %vm1638, %v1723, %v1722
    %v1725 = vsel %vm112, %v1724, 0
    %1727 = vmatpush.msra.mxu0 0.0
    %1728 = vmatpush.msra.mxu0 0.0
    %1729 = vmatpush.msra.mxu0 0.0
    %1730 = vmatpush.msra.mxu0 0.0
    %1731 = vmatpush.msra.mxu0 0.0
    %1732 = vmatpush.msra.mxu0 0.0
    %1733 = vmatpush.msra.mxu0 0.0
    %1734 = vmatpush.msra.mxu0 0.0
    %1735 = vmatpush.msra.mxu0 0.0
    %1736 = vmatpush.msra.mxu0 0.0
    %1737 = vmatpush.msra.mxu0 0.0
    %1738 = vmatpush.msra.mxu0 0.0
    %1739 = vmatpush.msra.mxu0 %v1721
    %1740 = vmatpush.msra.mxu0 %v1720
    %1741 = vmatpush.msra.mxu0 %v1719
    %1742 = vmatpush.msra.mxu0 %v1718
    %1743 = vmatmul.f32.gmra.mxu0 %v1725
    %v1744 = vpop.f32.mrf.mxu0
    %v1745 = vadd.f32 0.0, %v1744
    %1746 = vdwg.mxu0
    %v1747 = vadd.f32 %v1716, %v1745
    %s1748 = scalar_lea.vmem %s15, 128
    %v1749 = vld [vmem:[%s1748] sm:$0xff]
    %v1750 = vld [vmem:[%s1748 + $0x8] sm:$0xff]
    %v1751 = vld [vmem:[%s1748 + $0x10] sm:$0xff]
    %v1752 = vld [vmem:[%s1748 + $0x18] sm:$0xff]
    %v1753 = vrot.slane %v1624, 4
    %v1754 = vrot.slane %v1625, 3
    %v1755 = vsel %vm1638, %v1754, %v1753
    %v1756 = vsel %vm112, %v1755, 0
    %1758 = vmatpush.msra.mxu0 0.0
    %1759 = vmatpush.msra.mxu0 0.0
    %1760 = vmatpush.msra.mxu0 0.0
    %1761 = vmatpush.msra.mxu0 0.0
    %1762 = vmatpush.msra.mxu0 0.0
    %1763 = vmatpush.msra.mxu0 0.0
    %1764 = vmatpush.msra.mxu0 0.0
    %1765 = vmatpush.msra.mxu0 0.0
    %1766 = vmatpush.msra.mxu0 0.0
    %1767 = vmatpush.msra.mxu0 0.0
    %1768 = vmatpush.msra.mxu0 0.0
    %1769 = vmatpush.msra.mxu0 0.0
    %1770 = vmatpush.msra.mxu0 %v1752
    %1771 = vmatpush.msra.mxu0 %v1751
    %1772 = vmatpush.msra.mxu0 %v1750
    %1773 = vmatpush.msra.mxu0 %v1749
    %1774 = vmatmul.f32.gmra.mxu0 %v1756
    %v1775 = vpop.f32.mrf.mxu0
    %v1776 = vadd.f32 0.0, %v1775
    %1777 = vdwg.mxu0
    %v1778 = vadd.f32 %v1747, %v1776
    %s1779 = scalar_lea.vmem %s15, 160
    %v1780 = vld [vmem:[%s1779] sm:$0xff]
    %v1781 = vld [vmem:[%s1779 + $0x8] sm:$0xff]
    %v1782 = vld [vmem:[%s1779 + $0x10] sm:$0xff]
    %v1783 = vld [vmem:[%s1779 + $0x18] sm:$0xff]
    %v1784 = vrot.slane %v1624, 5
    %v1785 = vrot.slane %v1625, 4
    %v1786 = vsel %vm1638, %v1785, %v1784
    %v1787 = vsel %vm112, %v1786, 0
    %1789 = vmatpush.msra.mxu0 0.0
    %1790 = vmatpush.msra.mxu0 0.0
    %1791 = vmatpush.msra.mxu0 0.0
    %1792 = vmatpush.msra.mxu0 0.0
    %1793 = vmatpush.msra.mxu0 0.0
    %1794 = vmatpush.msra.mxu0 0.0
    %1795 = vmatpush.msra.mxu0 0.0
    %1796 = vmatpush.msra.mxu0 0.0
    %1797 = vmatpush.msra.mxu0 0.0
    %1798 = vmatpush.msra.mxu0 0.0
    %1799 = vmatpush.msra.mxu0 0.0
    %1800 = vmatpush.msra.mxu0 0.0
    %1801 = vmatpush.msra.mxu0 %v1783
    %1802 = vmatpush.msra.mxu0 %v1782
    %1803 = vmatpush.msra.mxu0 %v1781
    %1804 = vmatpush.msra.mxu0 %v1780
    %1805 = vmatmul.f32.gmra.mxu0 %v1787
    %v1806 = vpop.f32.mrf.mxu0
    %v1807 = vadd.f32 0.0, %v1806
    %1808 = vdwg.mxu0
    %v1809 = vadd.f32 %v1778, %v1807
    %s1810 = scalar_lea.vmem %s15, 192
    %v1811 = vld [vmem:[%s1810] sm:$0xff]
    %v1812 = vld [vmem:[%s1810 + $0x8] sm:$0xff]
    %v1813 = vld [vmem:[%s1810 + $0x10] sm:$0xff]
    %v1814 = vld [vmem:[%s1810 + $0x18] sm:$0xff]
    %v1815 = vrot.slane %v1624, 6
    %v1816 = vrot.slane %v1625, 5
    %v1817 = vsel %vm1638, %v1816, %v1815
    %v1818 = vsel %vm112, %v1817, 0
    %1820 = vmatpush.msra.mxu0 0.0
    %1821 = vmatpush.msra.mxu0 0.0
    %1822 = vmatpush.msra.mxu0 0.0
    %1823 = vmatpush.msra.mxu0 0.0
    %1824 = vmatpush.msra.mxu0 0.0
    %1825 = vmatpush.msra.mxu0 0.0
    %1826 = vmatpush.msra.mxu0 0.0
    %1827 = vmatpush.msra.mxu0 0.0
    %1828 = vmatpush.msra.mxu0 0.0
    %1829 = vmatpush.msra.mxu0 0.0
    %1830 = vmatpush.msra.mxu0 0.0
    %1831 = vmatpush.msra.mxu0 0.0
    %1832 = vmatpush.msra.mxu0 %v1814
    %1833 = vmatpush.msra.mxu0 %v1813
    %1834 = vmatpush.msra.mxu0 %v1812
    %1835 = vmatpush.msra.mxu0 %v1811
    %1836 = vmatmul.f32.gmra.mxu0 %v1818
    %v1837 = vpop.f32.mrf.mxu0
    %v1838 = vadd.f32 0.0, %v1837
    %1839 = vdwg.mxu0
    %v1840 = vadd.f32 %v1809, %v1838
    %s1841 = scalar_lea.vmem %s15, 224
    %v1842 = vld [vmem:[%s1841] sm:$0xff]
    %v1843 = vld [vmem:[%s1841 + $0x8] sm:$0xff]
    %v1844 = vld [vmem:[%s1841 + $0x10] sm:$0xff]
    %v1845 = vld [vmem:[%s1841 + $0x18] sm:$0xff]
    %v1846 = vrot.slane %v1624, 7
    %v1847 = vrot.slane %v1625, 6
    %v1848 = vsel %vm1638, %v1847, %v1846
    %v1849 = vsel %vm112, %v1848, 0
    %1851 = vmatpush.msra.mxu0 0.0
    %1852 = vmatpush.msra.mxu0 0.0
    %1853 = vmatpush.msra.mxu0 0.0
    %1854 = vmatpush.msra.mxu0 0.0
    %1855 = vmatpush.msra.mxu0 0.0
    %1856 = vmatpush.msra.mxu0 0.0
    %1857 = vmatpush.msra.mxu0 0.0
    %1858 = vmatpush.msra.mxu0 0.0
    %1859 = vmatpush.msra.mxu0 0.0
    %1860 = vmatpush.msra.mxu0 0.0
    %1861 = vmatpush.msra.mxu0 0.0
    %1862 = vmatpush.msra.mxu0 0.0
    %1863 = vmatpush.msra.mxu0 %v1845
    %1864 = vmatpush.msra.mxu0 %v1844
    %1865 = vmatpush.msra.mxu0 %v1843
    %1866 = vmatpush.msra.mxu0 %v1842
    %1867 = vmatmul.f32.gmra.mxu0 %v1849
    %v1868 = vpop.f32.mrf.mxu0
    %v1869 = vadd.f32 0.0, %v1868
    %1870 = vdwg.mxu0
    %v1871 = vadd.f32 %v1840, %v1869
    %v1872 = vld [vmem:[%s16] sm:$0x1]
    %v1874 = vperm.slane %v1872, 0
    %v1876 = vadd.f32 %v1871, %v1874
    %1877 = vst [vmem:[#allocation5] sm:$0x3] %v1876
    // Predicated region
    $region74: #{transformer_classify_forward.1} parent=1 // pred_check
      _
    $region75: #{transformer_classify_forward.1} parent=1 // pred_check_branch
      %1879 = sbr.rel (0) target = $region77
    $region76: #{transformer_classify_forward.1} parent=1 // pred_region
      %1881 = vsyncadd [#allocation4], 0
      %s1883 = sshll.u32 [#allocation5], 4
      %s1884 = int_to_ptr.vmem [resolvable:$true] %s1883
      %s1885 = sshll.u32 %s17, 4
      %s1886 = int_to_ptr.hbm [resolvable:$true] %s1885
      %1888 = dma.vmem_to_hbm [thread:$0]  %s1884, 32, %s1886, [#allocation4]
    $region77: #{transformer_classify_forward.1} parent=1 // pred_fallthru
      _
    // Predicated region
    $region78: #{transformer_classify_forward.1} parent=1 // pred_check
      _
    $region79: #{transformer_classify_forward.1} parent=1 // pred_check_branch
      %1890 = sbr.rel (0) target = $region81
    $region80: #{transformer_classify_forward.1} parent=1 // pred_region
      %1892 = dma.done [#allocation4], 32
    $region81: #{transformer_classify_forward.1} parent=1 // pred_fallthru
      _
    %1893 = vsyncpa [#allocation3], 1
    %1894 = vsyncpa [#allocation4], 1

</llo_original>
